<compile_context>
chip_gen: v7x
topology: tpu7x:2x2x1
jax: 0.10.0
libtpu: 0.0.40
codegen_flags: <defaults>
</compile_context>

<pallas_src>
import functools

import jax
import jax.numpy as jnp
import numpy as np
from jax.experimental import pallas as pl
from jax.experimental.pallas import tpu as pltpu


def _detect_kernel(x_ref, w_ref, p_ref, raw_ref, z_ref, *, nx, inv_nx, na):
    """One (batch, S-tile) step of fused 1x1-conv + sigmoid + box decode.

    x_ref  : (1, TS, Cin)     activations (compute dtype, e.g. bf16)
    w_ref  : (na, Cin, no)    1x1-conv weight (compute dtype)   -- resident
    p_ref  : (na, 6, no)      per-column decode constants (f32) -- resident
             rows: [bias, mul, wh-mask, sx, sy, off]
    raw_ref: (1, na, TS, no)  conv output  == torch x[i] after view+permute
    z_ref  : (1, na, TS, no)  decoded boxes (reshape -> torch z[i])
    """
    xt = x_ref[0]                                                   # (TS, Cin)
    ts = xt.shape[0]

    # Rebuild grid offsets for this S-tile in-registers (no HBM stream).
    lin = jax.lax.broadcasted_iota(jnp.int32, (ts, 1), 0) + pl.program_id(1) * ts
    lin_f = lin.astype(jnp.float32)
    # floor((s + 0.5) * (1/nx)) is exact for integer s at YOLO scales: the
    # true value is >= 0.5/nx away from any integer, far above f32 rounding.
    gy = jnp.floor((lin_f + 0.5) * jnp.float32(inv_nx))             # (TS, 1)
    gx = lin_f - gy * jnp.float32(nx)                               # (TS, 1)

    for a in range(na):                                             # na = 3, unrolled
        p = p_ref[a]                                                # (6, no)
        bias, mul, whm = p[0:1], p[1:2], p[2:3]
        sx, sy, off = p[3:4], p[4:5], p[5:6]

        raw = jnp.dot(xt, w_ref[a], preferred_element_type=jnp.float32) + bias
        raw_ref[0, a] = raw.astype(raw_ref.dtype)

        # sigmoid(x) = 0.5 * (1 + tanh(0.5*x)): single EUP op per element.
        sig = 0.5 + 0.5 * jnp.tanh(0.5 * raw)

        # xy: 2*stride*sig + stride*(g - 0.5); wh: (2*sig)^2*anchor; rest: sig.
        add = gx * sx + gy * sy + off                               # (TS, no)
        factor = whm * sig + (1.0 - whm)
        z_ref[0, a] = (sig * mul * factor + add).astype(z_ref.dtype)


def _choose_s_tile(s, max_tile=1024):
    """Pick the S tile: prefer an exact multiple-of-128 divisor near max_tile,
    otherwise use max_tile with a ragged (masked) last tile."""
    if s <= max_tile:
        return s
    top = (max_tile // 128) * 128
    t = top
    while t >= 512:
        if s % t == 0:
            return t
        t -= 128
    return top  # ragged last tile (grid uses pl.cdiv; boundary writes masked)


def detect_level(x_t, w, params, nx, *, max_tile=1024,
                 raw_dtype=jnp.float32, z_dtype=jnp.float32):
    """One detection level.

    x_t    : (bs, S, Cin)   activations, spatial-major, compute dtype
    w      : (na, Cin, no)  1x1-conv weight, compute dtype
    params : (na, 6, no)    decode constants (f32)
    Returns raw, z both shaped (bs, na, S, no).
    """
    bs, S, cin = x_t.shape
    na, _, no = w.shape
    C = na * no
    ts = _choose_s_tile(S, max_tile)
    n_s = int(pl.cdiv(S, ts))

    in_bpe = jnp.dtype(x_t.dtype).itemsize
    raw_bpe = jnp.dtype(raw_dtype).itemsize
    z_bpe = jnp.dtype(z_dtype).itemsize

    # VMEM budget (double-buffered streams + resident weights/params, with
    # (8,128) tile padding).  Never below the 32 MiB default, capped at 48 MiB
    # to leave compiler headroom (v7x has 64 MiB total VMEM per TC).
    pad = lambda n, m: -(-n // m) * m
    x_tile = pad(ts, 8) * pad(cin, 128) * in_bpe
    out_tiles = na * pad(ts, 8) * pad(no, 128) * (raw_bpe + z_bpe)
    w_bytes = na * pad(cin, 16) * pad(no, 128) * in_bpe
    p_bytes = na * pad(6, 8) * pad(no, 128) * 4
    est = 2 * (x_tile + out_tiles) + 2 * (w_bytes + p_bytes) + (2 << 20)
    vmem_limit = int(min(48 << 20, max(32 << 20, est)))

    cost = pl.CostEstimate(
        flops=int(2 * bs * S * C * cin + 12 * bs * S * C),
        transcendentals=int(bs * S * C),
        bytes_accessed=int(bs * S * cin * in_bpe
                           + bs * S * C * (raw_bpe + z_bpe)
                           + na * cin * no * in_bpe + na * 6 * no * 4),
    )

    grid_spec = pltpu.PrefetchScalarGridSpec(
        num_scalar_prefetch=0,
        grid=(bs, n_s),
        in_specs=[
            pl.BlockSpec((1, ts, cin), lambda b, s: (b, s, 0)),      # x: streamed
            pl.BlockSpec((na, cin, no), lambda b, s: (0, 0, 0)),     # w: resident
            pl.BlockSpec((na, 6, no), lambda b, s: (0, 0, 0)),       # params: resident
        ],
        out_specs=[
            pl.BlockSpec((1, na, ts, no), lambda b, s: (b, 0, s, 0)),  # raw
            pl.BlockSpec((1, na, ts, no), lambda b, s: (b, 0, s, 0)),  # z
        ],
    )
    return pl.pallas_call(
        functools.partial(_detect_kernel, nx=float(nx), inv_nx=float(1.0 / nx), na=na),
        out_shape=(jax.ShapeDtypeStruct((bs, na, S, no), raw_dtype),
                   jax.ShapeDtypeStruct((bs, na, S, no), z_dtype)),
        grid_spec=grid_spec,
        compiler_params=pltpu.CompilerParams(
            dimension_semantics=("parallel", "parallel"),
            vmem_limit_bytes=vmem_limit),
        cost_estimate=cost,
    )(x_t, w, params)


class DetectPallas:
    def __init__(self, nc, anchors, ch, stride, key,
                 compute_dtype=jnp.bfloat16, raw_dtype=jnp.float32):
        self.nc = nc
        self.no = nc + 5
        self.nl = len(anchors)
        self.na = len(anchors[0]) // 2
        self.anchors = jnp.asarray(anchors, jnp.float32).reshape(self.nl, -1, 2)
        self.stride = jnp.asarray(stride, jnp.float32)
        self.compute_dtype = compute_dtype
        # raw_dtype=bf16 halves HBM writeback of x_out (biggest win on v5e),
        # at the cost of deviating from the torch f32 conv output precision.
        self.raw_dtype = raw_dtype
        C = self.no * self.na
        keys = jax.random.split(key, 2 * self.nl)
        self.weights, self.biases, self.w_mxu, self.params = [], [], [], []
        for i, cin in enumerate(ch):
            # torch Conv2d weight is (Cout, Cin, 1, 1); kept as (Cout, Cin) for
            # the reference, and as (na, Cin, no) for the spatial-major kernel.
            w = jax.random.normal(keys[2 * i], (C, cin), jnp.float32) * 0.05
            b = jax.random.normal(keys[2 * i + 1], (C,), jnp.float32) * 0.05
            self.weights.append(w)
            self.biases.append(b)
            self.w_mxu.append(
                w.reshape(self.na, self.no, cin).transpose(0, 2, 1).astype(compute_dtype))
            self.params.append(self._decode_params(i, b))

    def _decode_params(self, i, bias):
        """(na, 6, no) per-output-column decode constants (independent of ny/nx).
        rows: [bias, mul, wh-mask, sx, sy, off]."""
        na, no = self.na, self.no
        stride = self.stride[i]
        anc = self.anchors[i]                                    # (na, 2)
        o = jnp.arange(no)
        is_xy = o < 2
        is_wh = (o >= 2) & (o < 4)
        bias_a = bias.reshape(na, no)
        anc_o = anc[:, jnp.clip(o - 2, 0, 1)]                    # (na, no)
        mul = jnp.where(is_xy[None, :], 2.0 * stride,
                        jnp.where(is_wh[None, :], 4.0 * anc_o, 1.0))
        whm = jnp.broadcast_to(is_wh.astype(jnp.float32), (na, no))
        sx = jnp.broadcast_to(jnp.where(o == 0, stride, 0.0), (na, no))
        sy = jnp.broadcast_to(jnp.where(o == 1, stride, 0.0), (na, no))
        off = jnp.broadcast_to(jnp.where(is_xy, -0.5 * stride, 0.0), (na, no))
        return jnp.stack([bias_a, mul, whm, sx, sy, off], axis=1).astype(jnp.float32)

    def __call__(self, xs):
        """xs: list of NCHW arrays. Returns (cat(z, 1), x_list) like torch eval."""
        z, x_out = [], []
        for i, x in enumerate(xs):
            bs, cin, ny, nx = x.shape
            S = ny * nx
            # Single fused XLA pass over the (small) activations:
            # NCHW -> spatial-major (bs, S, Cin) + cast to the MXU dtype.
            x_t = x.transpose(0, 2, 3, 1).reshape(bs, S, cin).astype(self.compute_dtype)
            raw, y = detect_level(x_t, self.w_mxu[i], self.params[i], nx,
                                  raw_dtype=self.raw_dtype)
            # Kernel outputs are already (bs, na, S, no): pure reshapes below.
            x_out.append(raw.reshape(bs, self.na, ny, nx, self.no))
            z.append(y.reshape(bs, self.na * S, self.no))
        return jnp.concatenate(z, axis=1), x_out


def reference_forward(det, xs):
    """Pure-JAX replica of the torch eval forward (for correctness check).

    Uses the same bf16-input / f32-accumulation matmul policy as the kernel
    (the torch module is f32; bf16 is the perf tradeoff requested in review),
    so the comparison isolates the Pallas kernel itself.
    """
    z, x_out = [], []
    for i, x in enumerate(xs):
        bs, cin, ny, nx = x.shape
        w_b = det.weights[i].astype(det.compute_dtype)
        x_b = x.astype(det.compute_dtype)
        conv = jnp.einsum('bchw,oc->bohw', x_b, w_b,
                          preferred_element_type=jnp.float32) \
            + det.biases[i][None, :, None, None]
        xi = conv.reshape(bs, det.na, det.no, ny, nx).transpose(0, 1, 3, 4, 2)
        x_out.append(xi)
        ys_, xs_ = jnp.meshgrid(jnp.arange(ny), jnp.arange(nx), indexing='ij')
        grid = jnp.stack((xs_, ys_), axis=2).reshape(1, 1, ny, nx, 2).astype(jnp.float32)
        y = jax.nn.sigmoid(xi)
        xy = (y[..., 0:2] * 2.0 - 0.5 + grid) * det.stride[i]
        wh = (y[..., 2:4] * 2.0) ** 2 * det.anchors[i].reshape(1, det.na, 1, 1, 2)
        y = jnp.concatenate([xy, wh, y[..., 4:]], axis=-1)
        z.append(y.reshape(bs, -1, det.no))
    return jnp.concatenate(z, axis=1), x_out


if __name__ == "__main__":
    key = jax.random.PRNGKey(0)
    k_param, k0, k1, k2 = jax.random.split(key, 4)

    nc = 80
    anchors = [[12, 16, 19, 36, 40, 28],
               [36, 75, 76, 55, 72, 146],
               [142, 110, 192, 243, 459, 401]]
    ch = (8, 16, 32)
    stride = (8.0, 16.0, 32.0)
    bs = 2

    det = DetectPallas(nc, anchors, ch, stride, k_param)

    xs = [
        jax.random.normal(k0, (bs, ch[0], 16, 16), jnp.float32),
        jax.random.normal(k1, (bs, ch[1], 8, 8), jnp.float32),
        jax.random.normal(k2, (bs, ch[2], 4, 4), jnp.float32),
    ]

    z_cat, x_list = det(xs)
    jax.block_until_ready(z_cat)
    for xo in x_list:
        jax.block_until_ready(xo)

    z_ref, x_ref = reference_forward(det, xs)
    # Tolerances: bf16 matmul accumulation-order differences + tanh-based
    # sigmoid in the kernel vs lax.logistic in the reference.
    np.testing.assert_allclose(np.asarray(z_cat), np.asarray(z_ref),
                               rtol=2e-2, atol=5e-2)
    for a, b in zip(x_list, x_ref):
        np.testing.assert_allclose(np.asarray(a), np.asarray(b),
                                   rtol=2e-2, atol=5e-2)

    print("KERNEL_OK")
</pallas_src>

<mosaic_0001>
module attributes {stable_mosaic.version = 11 : i64} {
  func.func @_detect_kernel(%arg0: i32, %arg1: i32, %arg2: memref<1x256x8xbf16, #tpu.memory_space<vmem>>, %arg3: memref<3x8x85xbf16, #tpu.memory_space<vmem>>, %arg4: memref<3x6x85xf32, #tpu.memory_space<vmem>>, %arg5: memref<1x3x256x85xf32, #tpu.memory_space<vmem>>, %arg6: memref<1x3x256x85xf32, #tpu.memory_space<vmem>>) attributes {dimension_semantics = [#tpu.dimension_semantics<parallel>, #tpu.dimension_semantics<parallel>], iteration_bounds = array<i64: 2, 1>, scalar_prefetch = 0 : i64, scratch_operands = 0 : i64, tpu.core_type = #tpu.core_type<tc>, window_params = [{transform_indices = @transform_0, window_bounds = array<i64: 1, 256, 8>}, {pipeline_mode = #tpu.pipeline_mode<synchronous>, transform_indices = @transform_1, window_bounds = array<i64: 3, 8, 85>}, {pipeline_mode = #tpu.pipeline_mode<synchronous>, transform_indices = @transform_2, window_bounds = array<i64: 3, 6, 85>}, {transform_indices = @transform_3, window_bounds = array<i64: 1, 3, 256, 85>}, {transform_indices = @transform_4, window_bounds = array<i64: 1, 3, 256, 85>}]} {
    %c0 = arith.constant 0 : index
    %c0_0 = arith.constant 0 : index
    %c0_1 = arith.constant 0 : index
    %0 = vector.load %arg2[%c0, %c0_0, %c0_1] : memref<1x256x8xbf16, #tpu.memory_space<vmem>>, vector<1x256x8xbf16>
    %1 = vector.shape_cast %0 : vector<1x256x8xbf16> to vector<256x8xbf16>
    %2 = tpu.iota {dimensions = array<i32: 0>} : vector<256x1xi32>
    %c256_i32 = arith.constant 256 : i32
    %3 = arith.muli %arg1, %c256_i32 : i32
    %4 = vector.broadcast %3 : i32 to vector<256x1xi32>
    %5 = arith.addi %2, %4 : vector<256x1xi32>
    %6 = arith.sitofp %5 : vector<256x1xi32> to vector<256x1xf32>
    %cst = arith.constant 5.000000e-01 : f32
    %7 = vector.broadcast %cst : f32 to vector<256x1xf32>
    %8 = arith.addf %6, %7 : vector<256x1xf32>
    %cst_2 = arith.constant 6.250000e-02 : f32
    %9 = vector.broadcast %cst_2 : f32 to vector<256x1xf32>
    %10 = arith.mulf %8, %9 : vector<256x1xf32>
    %11 = math.floor %10 : vector<256x1xf32>
    %cst_3 = arith.constant 1.600000e+01 : f32
    %12 = vector.broadcast %cst_3 : f32 to vector<256x1xf32>
    %13 = arith.mulf %11, %12 : vector<256x1xf32>
    %14 = arith.subf %6, %13 : vector<256x1xf32>
    %c0_4 = arith.constant 0 : index
    %c0_5 = arith.constant 0 : index
    %c0_6 = arith.constant 0 : index
    %15 = vector.load %arg4[%c0_4, %c0_5, %c0_6] : memref<3x6x85xf32, #tpu.memory_space<vmem>>, vector<1x6x85xf32>
    %16 = vector.shape_cast %15 : vector<1x6x85xf32> to vector<6x85xf32>
    %17 = vector.extract_strided_slice %16 {offsets = [0, 0], sizes = [1, 85], strides = [1, 1]} : vector<6x85xf32> to vector<1x85xf32>
    %18 = vector.extract_strided_slice %16 {offsets = [1, 0], sizes = [1, 85], strides = [1, 1]} : vector<6x85xf32> to vector<1x85xf32>
    %19 = vector.extract_strided_slice %16 {offsets = [2, 0], sizes = [1, 85], strides = [1, 1]} : vector<6x85xf32> to vector<1x85xf32>
    %20 = vector.extract_strided_slice %16 {offsets = [3, 0], sizes = [1, 85], strides = [1, 1]} : vector<6x85xf32> to vector<1x85xf32>
    %21 = vector.extract_strided_slice %16 {offsets = [4, 0], sizes = [1, 85], strides = [1, 1]} : vector<6x85xf32> to vector<1x85xf32>
    %22 = vector.extract_strided_slice %16 {offsets = [5, 0], sizes = [1, 85], strides = [1, 1]} : vector<6x85xf32> to vector<1x85xf32>
    %c0_7 = arith.constant 0 : index
    %c0_8 = arith.constant 0 : index
    %c0_9 = arith.constant 0 : index
    %23 = vector.load %arg3[%c0_7, %c0_8, %c0_9] : memref<3x8x85xbf16, #tpu.memory_space<vmem>>, vector<1x8x85xbf16>
    %24 = vector.shape_cast %23 : vector<1x8x85xbf16> to vector<8x85xbf16>
    %cst_10 = arith.constant dense<0.000000e+00> : vector<256x85xf32>
    %25 = tpu.matmul %1, %24, %cst_10 {dimension_numbers = #tpu.dot_dimension_numbers<[1], [0], [0], [1], [0, 0, 1, 1], [], []>} : vector<256x8xbf16>, vector<8x85xbf16>, vector<256x85xf32> -> vector<256x85xf32>
    %26 = vector.broadcast %17 : vector<1x85xf32> to vector<256x85xf32>
    %27 = arith.addf %25, %26 : vector<256x85xf32>
    %c0_11 = arith.constant 0 : index
    %c0_12 = arith.constant 0 : index
    %c0_13 = arith.constant 0 : index
    %c0_14 = arith.constant 0 : index
    %28 = vector.load %arg5[%c0_11, %c0_12, %c0_13, %c0_14] : memref<1x3x256x85xf32, #tpu.memory_space<vmem>>, vector<1x1x256x85xf32>
    %29 = vector.shape_cast %28 : vector<1x1x256x85xf32> to vector<256x85xf32>
    %30 = vector.shape_cast %27 : vector<256x85xf32> to vector<1x1x256x85xf32>
    tpu.vector_store %arg5[%c0_11, %c0_12, %c0_13, %c0_14], %30 {strides = array<i32>} : memref<1x3x256x85xf32, #tpu.memory_space<vmem>>, vector<1x1x256x85xf32>,
    %cst_15 = arith.constant 5.000000e-01 : f32
    %31 = vector.broadcast %cst_15 : f32 to vector<256x85xf32>
    %32 = arith.mulf %31, %27 : vector<256x85xf32>
    %33 = math.tanh %32 : vector<256x85xf32>
    %cst_16 = arith.constant 5.000000e-01 : f32
    %34 = vector.broadcast %cst_16 : f32 to vector<256x85xf32>
    %35 = arith.mulf %34, %33 : vector<256x85xf32>
    %cst_17 = arith.constant 5.000000e-01 : f32
    %36 = vector.broadcast %cst_17 : f32 to vector<256x85xf32>
    %37 = arith.addf %36, %35 : vector<256x85xf32>
    %38 = vector.broadcast %14 : vector<256x1xf32> to vector<256x85xf32>
    %39 = vector.broadcast %20 : vector<1x85xf32> to vector<256x85xf32>
    %40 = arith.mulf %38, %39 : vector<256x85xf32>
    %41 = vector.broadcast %11 : vector<256x1xf32> to vector<256x85xf32>
    %42 = vector.broadcast %21 : vector<1x85xf32> to vector<256x85xf32>
    %43 = arith.mulf %41, %42 : vector<256x85xf32>
    %44 = arith.addf %40, %43 : vector<256x85xf32>
    %45 = vector.broadcast %22 : vector<1x85xf32> to vector<256x85xf32>
    %46 = arith.addf %44, %45 : vector<256x85xf32>
    %47 = vector.broadcast %19 : vector<1x85xf32> to vector<256x85xf32>
    %48 = arith.mulf %47, %37 : vector<256x85xf32>
    %cst_18 = arith.constant 1.000000e+00 : f32
    %49 = vector.broadcast %cst_18 : f32 to vector<1x85xf32>
    %50 = arith.subf %49, %19 : vector<1x85xf32>
    %51 = vector.broadcast %50 : vector<1x85xf32> to vector<256x85xf32>
    %52 = arith.addf %48, %51 : vector<256x85xf32>
    %53 = vector.broadcast %18 : vector<1x85xf32> to vector<256x85xf32>
    %54 = arith.mulf %37, %53 : vector<256x85xf32>
    %55 = arith.mulf %54, %52 : vector<256x85xf32>
    %56 = arith.addf %55, %46 : vector<256x85xf32>
    %c0_19 = arith.constant 0 : index
    %c0_20 = arith.constant 0 : index
    %c0_21 = arith.constant 0 : index
    %c0_22 = arith.constant 0 : index
    %57 = vector.load %arg6[%c0_19, %c0_20, %c0_21, %c0_22] : memref<1x3x256x85xf32, #tpu.memory_space<vmem>>, vector<1x1x256x85xf32>
    %58 = vector.shape_cast %57 : vector<1x1x256x85xf32> to vector<256x85xf32>
    %59 = vector.shape_cast %56 : vector<256x85xf32> to vector<1x1x256x85xf32>
    tpu.vector_store %arg6[%c0_19, %c0_20, %c0_21, %c0_22], %59 {strides = array<i32>} : memref<1x3x256x85xf32, #tpu.memory_space<vmem>>, vector<1x1x256x85xf32>,
    %c1 = arith.constant 1 : index
    %c0_23 = arith.constant 0 : index
    %c0_24 = arith.constant 0 : index
    %60 = vector.load %arg4[%c1, %c0_23, %c0_24] : memref<3x6x85xf32, #tpu.memory_space<vmem>>, vector<1x6x85xf32>
    %61 = vector.shape_cast %60 : vector<1x6x85xf32> to vector<6x85xf32>
    %62 = vector.extract_strided_slice %61 {offsets = [0, 0], sizes = [1, 85], strides = [1, 1]} : vector<6x85xf32> to vector<1x85xf32>
    %63 = vector.extract_strided_slice %61 {offsets = [1, 0], sizes = [1, 85], strides = [1, 1]} : vector<6x85xf32> to vector<1x85xf32>
    %64 = vector.extract_strided_slice %61 {offsets = [2, 0], sizes = [1, 85], strides = [1, 1]} : vector<6x85xf32> to vector<1x85xf32>
    %65 = vector.extract_strided_slice %61 {offsets = [3, 0], sizes = [1, 85], strides = [1, 1]} : vector<6x85xf32> to vector<1x85xf32>
    %66 = vector.extract_strided_slice %61 {offsets = [4, 0], sizes = [1, 85], strides = [1, 1]} : vector<6x85xf32> to vector<1x85xf32>
    %67 = vector.extract_strided_slice %61 {offsets = [5, 0], sizes = [1, 85], strides = [1, 1]} : vector<6x85xf32> to vector<1x85xf32>
    %c1_25 = arith.constant 1 : index
    %c0_26 = arith.constant 0 : index
    %c0_27 = arith.constant 0 : index
    %68 = vector.load %arg3[%c1_25, %c0_26, %c0_27] : memref<3x8x85xbf16, #tpu.memory_space<vmem>>, vector<1x8x85xbf16>
    %69 = vector.shape_cast %68 : vector<1x8x85xbf16> to vector<8x85xbf16>
    %cst_28 = arith.constant dense<0.000000e+00> : vector<256x85xf32>
    %70 = tpu.matmul %1, %69, %cst_28 {dimension_numbers = #tpu.dot_dimension_numbers<[1], [0], [0], [1], [0, 0, 1, 1], [], []>} : vector<256x8xbf16>, vector<8x85xbf16>, vector<256x85xf32> -> vector<256x85xf32>
    %71 = vector.broadcast %62 : vector<1x85xf32> to vector<256x85xf32>
    %72 = arith.addf %70, %71 : vector<256x85xf32>
    %c0_29 = arith.constant 0 : index
    %c1_30 = arith.constant 1 : index
    %c0_31 = arith.constant 0 : index
    %c0_32 = arith.constant 0 : index
    %73 = vector.load %arg5[%c0_29, %c1_30, %c0_31, %c0_32] : memref<1x3x256x85xf32, #tpu.memory_space<vmem>>, vector<1x1x256x85xf32>
    %74 = vector.shape_cast %73 : vector<1x1x256x85xf32> to vector<256x85xf32>
    %75 = vector.shape_cast %72 : vector<256x85xf32> to vector<1x1x256x85xf32>
    tpu.vector_store %arg5[%c0_29, %c1_30, %c0_31, %c0_32], %75 {strides = array<i32>} : memref<1x3x256x85xf32, #tpu.memory_space<vmem>>, vector<1x1x256x85xf32>,
    %cst_33 = arith.constant 5.000000e-01 : f32
    %76 = vector.broadcast %cst_33 : f32 to vector<256x85xf32>
    %77 = arith.mulf %76, %72 : vector<256x85xf32>
    %78 = math.tanh %77 : vector<256x85xf32>
    %cst_34 = arith.constant 5.000000e-01 : f32
    %79 = vector.broadcast %cst_34 : f32 to vector<256x85xf32>
    %80 = arith.mulf %79, %78 : vector<256x85xf32>
    %cst_35 = arith.constant 5.000000e-01 : f32
    %81 = vector.broadcast %cst_35 : f32 to vector<256x85xf32>
    %82 = arith.addf %81, %80 : vector<256x85xf32>
    %83 = vector.broadcast %14 : vector<256x1xf32> to vector<256x85xf32>
    %84 = vector.broadcast %65 : vector<1x85xf32> to vector<256x85xf32>
    %85 = arith.mulf %83, %84 : vector<256x85xf32>
    %86 = vector.broadcast %11 : vector<256x1xf32> to vector<256x85xf32>
    %87 = vector.broadcast %66 : vector<1x85xf32> to vector<256x85xf32>
    %88 = arith.mulf %86, %87 : vector<256x85xf32>
    %89 = arith.addf %85, %88 : vector<256x85xf32>
    %90 = vector.broadcast %67 : vector<1x85xf32> to vector<256x85xf32>
    %91 = arith.addf %89, %90 : vector<256x85xf32>
    %92 = vector.broadcast %64 : vector<1x85xf32> to vector<256x85xf32>
    %93 = arith.mulf %92, %82 : vector<256x85xf32>
    %cst_36 = arith.constant 1.000000e+00 : f32
    %94 = vector.broadcast %cst_36 : f32 to vector<1x85xf32>
    %95 = arith.subf %94, %64 : vector<1x85xf32>
    %96 = vector.broadcast %95 : vector<1x85xf32> to vector<256x85xf32>
    %97 = arith.addf %93, %96 : vector<256x85xf32>
    %98 = vector.broadcast %63 : vector<1x85xf32> to vector<256x85xf32>
    %99 = arith.mulf %82, %98 : vector<256x85xf32>
    %100 = arith.mulf %99, %97 : vector<256x85xf32>
    %101 = arith.addf %100, %91 : vector<256x85xf32>
    %c0_37 = arith.constant 0 : index
    %c1_38 = arith.constant 1 : index
    %c0_39 = arith.constant 0 : index
    %c0_40 = arith.constant 0 : index
    %102 = vector.load %arg6[%c0_37, %c1_38, %c0_39, %c0_40] : memref<1x3x256x85xf32, #tpu.memory_space<vmem>>, vector<1x1x256x85xf32>
    %103 = vector.shape_cast %102 : vector<1x1x256x85xf32> to vector<256x85xf32>
    %104 = vector.shape_cast %101 : vector<256x85xf32> to vector<1x1x256x85xf32>
    tpu.vector_store %arg6[%c0_37, %c1_38, %c0_39, %c0_40], %104 {strides = array<i32>} : memref<1x3x256x85xf32, #tpu.memory_space<vmem>>, vector<1x1x256x85xf32>,
    %c2 = arith.constant 2 : index
    %c0_41 = arith.constant 0 : index
    %c0_42 = arith.constant 0 : index
    %105 = vector.load %arg4[%c2, %c0_41, %c0_42] : memref<3x6x85xf32, #tpu.memory_space<vmem>>, vector<1x6x85xf32>
    %106 = vector.shape_cast %105 : vector<1x6x85xf32> to vector<6x85xf32>
    %107 = vector.extract_strided_slice %106 {offsets = [0, 0], sizes = [1, 85], strides = [1, 1]} : vector<6x85xf32> to vector<1x85xf32>
    %108 = vector.extract_strided_slice %106 {offsets = [1, 0], sizes = [1, 85], strides = [1, 1]} : vector<6x85xf32> to vector<1x85xf32>
    %109 = vector.extract_strided_slice %106 {offsets = [2, 0], sizes = [1, 85], strides = [1, 1]} : vector<6x85xf32> to vector<1x85xf32>
    %110 = vector.extract_strided_slice %106 {offsets = [3, 0], sizes = [1, 85], strides = [1, 1]} : vector<6x85xf32> to vector<1x85xf32>
    %111 = vector.extract_strided_slice %106 {offsets = [4, 0], sizes = [1, 85], strides = [1, 1]} : vector<6x85xf32> to vector<1x85xf32>
    %112 = vector.extract_strided_slice %106 {offsets = [5, 0], sizes = [1, 85], strides = [1, 1]} : vector<6x85xf32> to vector<1x85xf32>
    %c2_43 = arith.constant 2 : index
    %c0_44 = arith.constant 0 : index
    %c0_45 = arith.constant 0 : index
    %113 = vector.load %arg3[%c2_43, %c0_44, %c0_45] : memref<3x8x85xbf16, #tpu.memory_space<vmem>>, vector<1x8x85xbf16>
    %114 = vector.shape_cast %113 : vector<1x8x85xbf16> to vector<8x85xbf16>
    %cst_46 = arith.constant dense<0.000000e+00> : vector<256x85xf32>
    %115 = tpu.matmul %1, %114, %cst_46 {dimension_numbers = #tpu.dot_dimension_numbers<[1], [0], [0], [1], [0, 0, 1, 1], [], []>} : vector<256x8xbf16>, vector<8x85xbf16>, vector<256x85xf32> -> vector<256x85xf32>
    %116 = vector.broadcast %107 : vector<1x85xf32> to vector<256x85xf32>
    %117 = arith.addf %115, %116 : vector<256x85xf32>
    %c0_47 = arith.constant 0 : index
    %c2_48 = arith.constant 2 : index
    %c0_49 = arith.constant 0 : index
    %c0_50 = arith.constant 0 : index
    %118 = vector.load %arg5[%c0_47, %c2_48, %c0_49, %c0_50] : memref<1x3x256x85xf32, #tpu.memory_space<vmem>>, vector<1x1x256x85xf32>
    %119 = vector.shape_cast %118 : vector<1x1x256x85xf32> to vector<256x85xf32>
    %120 = vector.shape_cast %117 : vector<256x85xf32> to vector<1x1x256x85xf32>
    tpu.vector_store %arg5[%c0_47, %c2_48, %c0_49, %c0_50], %120 {strides = array<i32>} : memref<1x3x256x85xf32, #tpu.memory_space<vmem>>, vector<1x1x256x85xf32>,
    %cst_51 = arith.constant 5.000000e-01 : f32
    %121 = vector.broadcast %cst_51 : f32 to vector<256x85xf32>
    %122 = arith.mulf %121, %117 : vector<256x85xf32>
    %123 = math.tanh %122 : vector<256x85xf32>
    %cst_52 = arith.constant 5.000000e-01 : f32
    %124 = vector.broadcast %cst_52 : f32 to vector<256x85xf32>
    %125 = arith.mulf %124, %123 : vector<256x85xf32>
    %cst_53 = arith.constant 5.000000e-01 : f32
    %126 = vector.broadcast %cst_53 : f32 to vector<256x85xf32>
    %127 = arith.addf %126, %125 : vector<256x85xf32>
    %128 = vector.broadcast %14 : vector<256x1xf32> to vector<256x85xf32>
    %129 = vector.broadcast %110 : vector<1x85xf32> to vector<256x85xf32>
    %130 = arith.mulf %128, %129 : vector<256x85xf32>
    %131 = vector.broadcast %11 : vector<256x1xf32> to vector<256x85xf32>
    %132 = vector.broadcast %111 : vector<1x85xf32> to vector<256x85xf32>
    %133 = arith.mulf %131, %132 : vector<256x85xf32>
    %134 = arith.addf %130, %133 : vector<256x85xf32>
    %135 = vector.broadcast %112 : vector<1x85xf32> to vector<256x85xf32>
    %136 = arith.addf %134, %135 : vector<256x85xf32>
    %137 = vector.broadcast %109 : vector<1x85xf32> to vector<256x85xf32>
    %138 = arith.mulf %137, %127 : vector<256x85xf32>
    %cst_54 = arith.constant 1.000000e+00 : f32
    %139 = vector.broadcast %cst_54 : f32 to vector<1x85xf32>
    %140 = arith.subf %139, %109 : vector<1x85xf32>
    %141 = vector.broadcast %140 : vector<1x85xf32> to vector<256x85xf32>
    %142 = arith.addf %138, %141 : vector<256x85xf32>
    %143 = vector.broadcast %108 : vector<1x85xf32> to vector<256x85xf32>
    %144 = arith.mulf %127, %143 : vector<256x85xf32>
    %145 = arith.mulf %144, %142 : vector<256x85xf32>
    %146 = arith.addf %145, %136 : vector<256x85xf32>
    %c0_55 = arith.constant 0 : index
    %c2_56 = arith.constant 2 : index
    %c0_57 = arith.constant 0 : index
    %c0_58 = arith.constant 0 : index
    %147 = vector.load %arg6[%c0_55, %c2_56, %c0_57, %c0_58] : memref<1x3x256x85xf32, #tpu.memory_space<vmem>>, vector<1x1x256x85xf32>
    %148 = vector.shape_cast %147 : vector<1x1x256x85xf32> to vector<256x85xf32>
    %149 = vector.shape_cast %146 : vector<256x85xf32> to vector<1x1x256x85xf32>
    tpu.vector_store %arg6[%c0_55, %c2_56, %c0_57, %c0_58], %149 {strides = array<i32>} : memref<1x3x256x85xf32, #tpu.memory_space<vmem>>, vector<1x1x256x85xf32>,
    return
  }
  func.func @transform_0(%arg0: i32, %arg1: i32) -> (i32, i32, i32) {
    %c0_i32 = arith.constant 0 : i32
    %c0_i32_0 = arith.constant 0 : i32
    return %arg0, %arg1, %c0_i32 : i32, i32, i32
  }
  func.func @transform_1(%arg0: i32, %arg1: i32) -> (i32, i32, i32) {
    %c0_i32 = arith.constant 0 : i32
    %c0_i32_0 = arith.constant 0 : i32
    %c0_i32_1 = arith.constant 0 : i32
    %c0_i32_2 = arith.constant 0 : i32
    return %c0_i32, %c0_i32_0, %c0_i32_1 : i32, i32, i32
  }
  func.func @transform_2(%arg0: i32, %arg1: i32) -> (i32, i32, i32) {
    %c0_i32 = arith.constant 0 : i32
    %c0_i32_0 = arith.constant 0 : i32
    %c0_i32_1 = arith.constant 0 : i32
    %c0_i32_2 = arith.constant 0 : i32
    return %c0_i32, %c0_i32_0, %c0_i32_1 : i32, i32, i32
  }
  func.func @transform_3(%arg0: i32, %arg1: i32) -> (i32, i32, i32, i32) {
    %c0_i32 = arith.constant 0 : i32
    %c0_i32_0 = arith.constant 0 : i32
    %c0_i32_1 = arith.constant 0 : i32
    return %arg0, %c0_i32, %arg1, %c0_i32_0 : i32, i32, i32, i32
  }
  func.func @transform_4(%arg0: i32, %arg1: i32) -> (i32, i32, i32, i32) {
    %c0_i32 = arith.constant 0 : i32
    %c0_i32_0 = arith.constant 0 : i32
    %c0_i32_1 = arith.constant 0 : i32
    return %arg0, %c0_i32, %arg1, %c0_i32_0 : i32, i32, i32, i32
  }
}

</mosaic_0001>

<llo_original>
// kernel: tpu_custom_call.1
$region0: #{tpu_custom_call.1}
  #allocation0 [shape = 'u32[]', space=smem, size = 0x4, offset = 0x4, fixed_abs, tag = 'smem constant byte address 0x4 - core index']
  #allocation1 [shape = 'u32[144,128]{1,0:T(1,128)}', space=vmem, size = 0x12000, scoped, tag = 'internal scratch']
  %s0 = inlined_call_operand.vmem [shape: bf16[2,256,8], index: 0, kind: input, shape index: {}]
  %s1 = inlined_call_operand.vmem [shape: bf16[3,8,85], index: 1, kind: input, shape index: {}]
  %s2 = inlined_call_operand.vmem [shape: f32[3,6,85], index: 2, kind: input, shape index: {}]
  %s3 = inlined_call_operand.vmem [shape: f32[2,3,256,85], index: 3, kind: output, shape index: {0}]
  %s4 = inlined_call_operand.vmem [shape: f32[2,3,256,85], index: 4, kind: output, shape index: {1}]
  %5 = xla_tuple %s3, %s4
  %s6 = sld [smem:[#allocation0]]
  $region53: #{tpu_custom_call.1} parent=0
    _
  %s8 = ssub.s32 1, %s6
  %s9 = scalar_select 0, %s8, %s6
  loop: start=0, step=1, limit=4
  $region2: #{tpu_custom_call.1} parent=0 // loop_pre_header
    _
  $region3: #{tpu_custom_call.1} parent=0 // loop_header
    %s11 = sphi 0, %s15
    %p12 = scmp.ge.s32.totalorder %s11, 4
    %s18 = sphi 0, %s30
    %s19 = sphi 0, %s26
    %s20 = sphi 0, %s18
    %s21 = sphi 0, %s19
    %s22 = sphi 0, %s20
    %s23 = sphi 0, %s21
    %s35 = sphi 0, %s37
    %s38 = sphi 0, %s35
    %s39 = sphi 0, %s38
    %s55 = sphi 0, %s39
    %s59 = sphi 0, %s59
    %s61 = sphi 0, %s59
    %s62 = sphi 0, %s61
    %s76 = sphi 0, %s62
    %s80 = sphi 0, %s80
    %s82 = sphi 0, %s80
    %s83 = sphi 0, %s82
    %s97 = sphi 0, %s83
    %s105 = sphi 0, %s107
    %s108 = sphi 0, %s105
    %s109 = sphi 0, %s108
    %s125 = sphi 0, %s109
    %s133 = sphi 0, %s135
    %s136 = sphi 0, %s133
    %s137 = sphi 0, %s136
    %s153 = sphi 0, %s137
  $region4: #{tpu_custom_call.1} parent=0 // loop_header_branch
    %14 = sbr.rel (%p12) target = $region8
  $region5: #{tpu_custom_call.1} parent=0 // loop_body
    %s16 = ssub.s32 %s11, 1
    %s17 = ssub.s32 %s11, 2
    %s24 = sadd.s32 1, %s19
    %p25 = scmp.ge.s32.totalorder %s24, 1
    %s26 = scalar_select %p25, 0, %s24
    %s27 = sadd.s32 1, %s18
    %s28 = scalar_select %p25, %s27, %s18
    %p29 = scmp.ge.s32.totalorder %s28, 2
    %s30 = scalar_select %p29, 0, %s28
    %s31 = ssub.s32 %s18, %s30
    %s32 = ssub.s32 %s19, %s26
    %s33 = sor.u32 %s31, %s32
    %p34 = scmp.eq.s32.totalorder %s33, 0
    %s36 = sadd.s32 %s35, 1
    %s37 = scalar_select %p34, %s35, %s36
    %p40 = pneg %p34
    %p41 = scmp.eq.s32.totalorder %s11, 1
    %p42 = por %p40, %p41
    %p43 = scmp.ne.s32.totalorder %s35, %s38
    %p44 = scmp.eq.s32.totalorder %s11, 0
    %p45 = por %p43, %p44
    %p46 = scmp.ne.s32.totalorder %s35, %s38
    %p47 = scmp.eq.s32.totalorder %s16, 1
    %p48 = por %p46, %p47
    %p49 = scmp.ne.s32.totalorder %s38, %s39
    %p50 = scmp.eq.s32.totalorder %s16, 0
    %p51 = por %p49, %p50
    %p52 = scmp.ne.s32.totalorder %s38, %s39
    %p53 = scmp.eq.s32.totalorder %s17, 1
    %p54 = por %p52, %p53
    %p56 = scmp.ne.s32.totalorder %s39, %s55
    %p57 = scmp.eq.s32.totalorder %s17, 0
    %p58 = por %p56, %p57
    %s60 = sadd.s32 %s59, 1
    %p63 = scmp.eq.s32.totalorder %s11, 1
    %p64 = scmp.ne.s32.totalorder %s59, %s61
    %p65 = scmp.eq.s32.totalorder %s11, 0
    %p66 = por %p64, %p65
    %p67 = scmp.ne.s32.totalorder %s59, %s61
    %p68 = scmp.eq.s32.totalorder %s16, 1
    %p69 = por %p67, %p68
    %p70 = scmp.ne.s32.totalorder %s61, %s62
    %p71 = scmp.eq.s32.totalorder %s16, 0
    %p72 = por %p70, %p71
    %p73 = scmp.ne.s32.totalorder %s61, %s62
    %p74 = scmp.eq.s32.totalorder %s17, 1
    %p75 = por %p73, %p74
    %p77 = scmp.ne.s32.totalorder %s62, %s76
    %p78 = scmp.eq.s32.totalorder %s17, 0
    %p79 = por %p77, %p78
    %s81 = sadd.s32 %s80, 1
    %p84 = scmp.eq.s32.totalorder %s11, 1
    %p85 = scmp.ne.s32.totalorder %s80, %s82
    %p86 = scmp.eq.s32.totalorder %s11, 0
    %p87 = por %p85, %p86
    %p88 = scmp.ne.s32.totalorder %s80, %s82
    %p89 = scmp.eq.s32.totalorder %s16, 1
    %p90 = por %p88, %p89
    %p91 = scmp.ne.s32.totalorder %s82, %s83
    %p92 = scmp.eq.s32.totalorder %s16, 0
    %p93 = por %p91, %p92
    %p94 = scmp.ne.s32.totalorder %s82, %s83
    %p95 = scmp.eq.s32.totalorder %s17, 1
    %p96 = por %p94, %p95
    %p98 = scmp.ne.s32.totalorder %s83, %s97
    %p99 = scmp.eq.s32.totalorder %s17, 0
    %p100 = por %p98, %p99
    %s101 = ssub.s32 %s18, %s30
    %s102 = ssub.s32 %s19, %s26
    %s103 = sor.u32 %s101, %s102
    %p104 = scmp.eq.s32.totalorder %s103, 0
    %s106 = sadd.s32 %s105, 1
    %s107 = scalar_select %p104, %s105, %s106
    %p110 = pneg %p104
    %p111 = scmp.eq.s32.totalorder %s11, 1
    %p112 = por %p110, %p111
    %p113 = scmp.ne.s32.totalorder %s105, %s108
    %p114 = scmp.eq.s32.totalorder %s11, 0
    %p115 = por %p113, %p114
    %p116 = scmp.ne.s32.totalorder %s105, %s108
    %p117 = scmp.eq.s32.totalorder %s16, 1
    %p118 = por %p116, %p117
    %p119 = scmp.ne.s32.totalorder %s108, %s109
    %p120 = scmp.eq.s32.totalorder %s16, 0
    %p121 = por %p119, %p120
    %p122 = scmp.ne.s32.totalorder %s108, %s109
    %p123 = scmp.eq.s32.totalorder %s17, 1
    %p124 = por %p122, %p123
    %p126 = scmp.ne.s32.totalorder %s109, %s125
    %p127 = scmp.eq.s32.totalorder %s17, 0
    %p128 = por %p126, %p127
    %s129 = ssub.s32 %s18, %s30
    %s130 = ssub.s32 %s19, %s26
    %s131 = sor.u32 %s129, %s130
    %p132 = scmp.eq.s32.totalorder %s131, 0
    %s134 = sadd.s32 %s133, 1
    %s135 = scalar_select %p132, %s133, %s134
    %p138 = pneg %p132
    %p139 = scmp.eq.s32.totalorder %s11, 1
    %p140 = por %p138, %p139
    %p141 = scmp.ne.s32.totalorder %s133, %s136
    %p142 = scmp.eq.s32.totalorder %s11, 0
    %p143 = por %p141, %p142
    %p144 = scmp.ne.s32.totalorder %s133, %s136
    %p145 = scmp.eq.s32.totalorder %s16, 1
    %p146 = por %p144, %p145
    %p147 = scmp.ne.s32.totalorder %s136, %s137
    %p148 = scmp.eq.s32.totalorder %s16, 0
    %p149 = por %p147, %p148
    %p150 = scmp.ne.s32.totalorder %s136, %s137
    %p151 = scmp.eq.s32.totalorder %s17, 1
    %p152 = por %p150, %p151
    %p154 = scmp.ne.s32.totalorder %s137, %s153
    %p155 = scmp.eq.s32.totalorder %s17, 0
    %p156 = por %p154, %p155
    %p157 = scmp.le.s32.totalorder 1, %s11
    %p158 = scmp.lt.s32.totalorder %s11, 3
    %p159 = pnand %p157, %p158
    %p160 = pneg %p159
    // Predicated region
    $region9: #{tpu_custom_call.1} parent=5 // pred_check
      _
    $region10: #{tpu_custom_call.1} parent=5 // pred_check_branch
      %162 = sbr.rel (%p159) target = $region12
    $region11: #{tpu_custom_call.1} parent=5 // pred_region
      %s163 = ssub.s32 %s11, 1
      // Predicated region
      $region13: #{tpu_custom_call.1} parent=11 // pred_check
        %p164 = pneg %p72
      $region14: #{tpu_custom_call.1} parent=11 // pred_check_branch
        %166 = sbr.rel (%p164) target = $region16
      $region15: #{tpu_custom_call.1} parent=11 // pred_region
        _
      $region16: #{tpu_custom_call.1} parent=11 // pred_fallthru
        _
      // Predicated region
      $region17: #{tpu_custom_call.1} parent=11 // pred_check
        %p167 = pneg %p93
      $region18: #{tpu_custom_call.1} parent=11 // pred_check_branch
        %169 = sbr.rel (%p167) target = $region20
      $region19: #{tpu_custom_call.1} parent=11 // pred_region
        _
      $region20: #{tpu_custom_call.1} parent=11 // pred_fallthru
        _
    $region12: #{tpu_custom_call.1} parent=5 // pred_fallthru
      _
    %p170 = scmp.lt.s32.totalorder %s11, 2
    // Predicated region
    $region21: #{tpu_custom_call.1} parent=5 // pred_check
      %p171 = pneg %p170
    $region22: #{tpu_custom_call.1} parent=5 // pred_check_branch
      %173 = sbr.rel (%p171) target = $region24
    $region23: #{tpu_custom_call.1} parent=5 // pred_region
      // Predicated region
      $region25: #{tpu_custom_call.1} parent=23 // pred_check
        %p174 = pneg %p45
      $region26: #{tpu_custom_call.1} parent=23 // pred_check_branch
        %176 = sbr.rel (%p174) target = $region28
      $region27: #{tpu_custom_call.1} parent=23 // pred_region
        %s177 = smul.u32 32, %s19
        %p178 = scmp.lt.s32.totalorder %s18, 1
        %s179 = scalar_select %p178, %s18, 1
        %p180 = scmp.lt.s32.totalorder %s177, 31
        %s181 = scalar_select %p180, %s177, 31
        %s182 = smul.addr %s179, 32
        %s183 = sadd.s32 %s181, %s182
        %s184 = smul.addr %s183, 4
        %s185 = scalar_lea.vmem %s0, %s184
        %s186 = smul.u32 32, %s19
      $region28: #{tpu_custom_call.1} parent=23 // pred_fallthru
        _
    $region24: #{tpu_custom_call.1} parent=5 // pred_fallthru
      _
    %p187 = scmp.le.s32.totalorder 1, %s11
    %p188 = scmp.lt.s32.totalorder %s11, 3
    %p189 = pnand %p187, %p188
    %p190 = pneg %p189
    // Predicated region
    $region29: #{tpu_custom_call.1} parent=5 // pred_check
      _
    $region30: #{tpu_custom_call.1} parent=5 // pred_check_branch
      %192 = sbr.rel (%p189) target = $region32
    $region31: #{tpu_custom_call.1} parent=5 // pred_region
      %s193 = ssub.s32 %s11, 1
      %s194 = smul.u32 32, %s21
      %p195 = scmp.lt.s32.totalorder %s20, 1
      %s196 = scalar_select %p195, %s20, 1
      %p197 = scmp.lt.s32.totalorder %s194, 31
      %s198 = scalar_select %p197, %s194, 31
      %s199 = smul.addr %s196, 32
      %s200 = sadd.s32 %s198, %s199
      %s201 = smul.addr %s200, 4
      %s202 = scalar_lea.vmem %s0, %s201
      %p203 = pneg %p51
      %p204 = pneg %p48
      %p205 = pneg %p72
      %p206 = pneg %p69
      %p207 = pneg %p93
      %p208 = pneg %p90
      %p209 = pneg %p121
      %p210 = pneg %p118
      %s211 = smul.u32 32, %s21
      %p212 = scmp.lt.s32.totalorder %s20, 1
      %s213 = scalar_select %p212, %s20, 1
      %p214 = scmp.lt.s32.totalorder %s211, 31
      %s215 = scalar_select %p214, %s211, 31
      %s216 = smul.addr %s213, 96
      %s217 = sadd.s32 %s215, %s216
      %s218 = smul.addr %s217, 8
      %s219 = scalar_lea.vmem %s3, %s218
      %p220 = pneg %p149
      %p221 = pneg %p146
      %s222 = smul.u32 32, %s21
      %p223 = scmp.lt.s32.totalorder %s20, 1
      %s224 = scalar_select %p223, %s20, 1
      %p225 = scmp.lt.s32.totalorder %s222, 31
      %s226 = scalar_select %p225, %s222, 31
      %s227 = smul.addr %s224, 96
      %s228 = sadd.s32 %s226, %s227
      %s229 = smul.addr %s228, 8
      %s230 = scalar_lea.vmem %s4, %s229
      %s231 = smul.u32 32, %s21
      %p232 = scmp.lt.s32.totalorder %s20, 1
      %s233 = scalar_select %p232, %s20, 1
      %p234 = scmp.lt.s32.totalorder %s231, 31
      %s235 = scalar_select %p234, %s231, 31
      %s236 = smul.addr %s233, 32
      %s237 = sadd.s32 %s235, %s236
      %s238 = smul.addr %s237, 4
      %s239 = scalar_lea.vmem %s0, %s238
      %s240 = smul.u32 32, %s21
      %s241 = smul.u32 32, %s21
      %p242 = scmp.lt.s32.totalorder %s20, 1
      %s243 = scalar_select %p242, %s20, 1
      %p244 = scmp.lt.s32.totalorder %s241, 31
      %s245 = scalar_select %p244, %s241, 31
      %s246 = smul.addr %s243, 96
      %s247 = sadd.s32 %s245, %s246
      %s248 = smul.addr %s247, 8
      %s249 = scalar_lea.vmem %s3, %s248
      %s250 = smul.u32 32, %s21
      %s251 = smul.u32 32, %s21
      %p252 = scmp.lt.s32.totalorder %s20, 1
      %s253 = scalar_select %p252, %s20, 1
      %p254 = scmp.lt.s32.totalorder %s251, 31
      %s255 = scalar_select %p254, %s251, 31
      %s256 = smul.addr %s253, 96
      %s257 = sadd.s32 %s255, %s256
      %s258 = smul.addr %s257, 8
      %s259 = scalar_lea.vmem %s4, %s258
      %s260 = smul.u32 32, %s21
      %v262 = vld [vmem:[%s239] sm:$0xf]
      %v263 = vld [vmem:[%s239 + $0x4] sm:$0xf]
      %v264 = vld [vmem:[%s239 + $0x8] sm:$0xf]
      %v265 = vld [vmem:[%s239 + $0xc] sm:$0xf]
      %v266 = vld [vmem:[%s239 + $0x10] sm:$0xf]
      %v267 = vld [vmem:[%s239 + $0x14] sm:$0xf]
      %v268 = vld [vmem:[%s239 + $0x18] sm:$0xf]
      %v269 = vld [vmem:[%s239 + $0x1c] sm:$0xf]
      %v270 = vld [vmem:[%s239 + $0x20] sm:$0xf]
      %v271 = vld [vmem:[%s239 + $0x24] sm:$0xf]
      %v272 = vld [vmem:[%s239 + $0x28] sm:$0xf]
      %v273 = vld [vmem:[%s239 + $0x2c] sm:$0xf]
      %v274 = vld [vmem:[%s239 + $0x30] sm:$0xf]
      %v275 = vld [vmem:[%s239 + $0x34] sm:$0xf]
      %v276 = vld [vmem:[%s239 + $0x38] sm:$0xf]
      %v277 = vld [vmem:[%s239 + $0x3c] sm:$0xf]
      %v278 = vld [vmem:[%s239 + $0x40] sm:$0xf]
      %v279 = vld [vmem:[%s239 + $0x44] sm:$0xf]
      %v280 = vld [vmem:[%s239 + $0x48] sm:$0xf]
      %v281 = vld [vmem:[%s239 + $0x4c] sm:$0xf]
      %v282 = vld [vmem:[%s239 + $0x50] sm:$0xf]
      %v283 = vld [vmem:[%s239 + $0x54] sm:$0xf]
      %v284 = vld [vmem:[%s239 + $0x58] sm:$0xf]
      %v285 = vld [vmem:[%s239 + $0x5c] sm:$0xf]
      %v286 = vld [vmem:[%s239 + $0x60] sm:$0xf]
      %v287 = vld [vmem:[%s239 + $0x64] sm:$0xf]
      %v288 = vld [vmem:[%s239 + $0x68] sm:$0xf]
      %v289 = vld [vmem:[%s239 + $0x6c] sm:$0xf]
      %v290 = vld [vmem:[%s239 + $0x70] sm:$0xf]
      %v291 = vld [vmem:[%s239 + $0x74] sm:$0xf]
      %v292 = vld [vmem:[%s239 + $0x78] sm:$0xf]
      %v293 = vld [vmem:[%s239 + $0x7c] sm:$0xf]
      %v294 = vlaneseq
      %v295 = vshrl.u32 %v294, 7
      %v296 = vadd.s32 %v295, 8
      %v297 = vadd.s32 %v295, 16
      %v298 = vadd.s32 %v295, 24
      %v299 = vadd.s32 %v295, 32
      %v300 = vadd.s32 %v295, 40
      %v301 = vadd.s32 %v295, 48
      %v302 = vadd.s32 %v295, 56
      %v303 = vadd.s32 %v295, 64
      %v304 = vadd.s32 %v295, 72
      %v305 = vadd.s32 %v295, 80
      %v306 = vadd.s32 %v295, 88
      %v307 = vadd.s32 %v295, 96
      %v308 = vadd.s32 %v295, 104
      %v309 = vadd.s32 %v295, 112
      %v310 = vadd.s32 %v295, 120
      %v311 = vadd.s32 %v295, 128
      %v312 = vadd.s32 %v295, 136
      %v313 = vadd.s32 %v295, 144
      %v314 = vadd.s32 %v295, 152
      %v315 = vadd.s32 %v295, 160
      %v316 = vadd.s32 %v295, 168
      %v317 = vadd.s32 %v295, 176
      %v318 = vadd.s32 %v295, 184
      %v319 = vadd.s32 %v295, 192
      %v320 = vadd.s32 %v295, 200
      %v321 = vadd.s32 %v295, 208
      %v322 = vadd.s32 %v295, 216
      %v323 = vadd.s32 %v295, 224
      %v324 = vadd.s32 %v295, 232
      %v325 = vadd.s32 %v295, 240
      %v326 = vadd.s32 %v295, 248
      %s327 = smul.u32 %s21, 256
      %v328 = vstv %s327
      %v329 = vadd.s32 %v295, %v328
      %v330 = vadd.s32 %v296, %v328
      %v331 = vadd.s32 %v297, %v328
      %v332 = vadd.s32 %v298, %v328
      %v333 = vadd.s32 %v299, %v328
      %v334 = vadd.s32 %v300, %v328
      %v335 = vadd.s32 %v301, %v328
      %v336 = vadd.s32 %v302, %v328
      %v337 = vadd.s32 %v303, %v328
      %v338 = vadd.s32 %v304, %v328
      %v339 = vadd.s32 %v305, %v328
      %v340 = vadd.s32 %v306, %v328
      %v341 = vadd.s32 %v307, %v328
      %v342 = vadd.s32 %v308, %v328
      %v343 = vadd.s32 %v309, %v328
      %v344 = vadd.s32 %v310, %v328
      %v345 = vadd.s32 %v311, %v328
      %v346 = vadd.s32 %v312, %v328
      %v347 = vadd.s32 %v313, %v328
      %v348 = vadd.s32 %v314, %v328
      %v349 = vadd.s32 %v315, %v328
      %v350 = vadd.s32 %v316, %v328
      %v351 = vadd.s32 %v317, %v328
      %v352 = vadd.s32 %v318, %v328
      %v353 = vadd.s32 %v319, %v328
      %v354 = vadd.s32 %v320, %v328
      %v355 = vadd.s32 %v321, %v328
      %v356 = vadd.s32 %v322, %v328
      %v357 = vadd.s32 %v323, %v328
      %v358 = vadd.s32 %v324, %v328
      %v359 = vadd.s32 %v325, %v328
      %v360 = vadd.s32 %v326, %v328
      %v361 = vcvt.s32.f32 %v329
      %v362 = vcvt.s32.f32 %v330
      %v363 = vcvt.s32.f32 %v331
      %v364 = vcvt.s32.f32 %v332
      %v365 = vcvt.s32.f32 %v333
      %v366 = vcvt.s32.f32 %v334
      %v367 = vcvt.s32.f32 %v335
      %v368 = vcvt.s32.f32 %v336
      %v369 = vcvt.s32.f32 %v337
      %v370 = vcvt.s32.f32 %v338
      %v371 = vcvt.s32.f32 %v339
      %v372 = vcvt.s32.f32 %v340
      %v373 = vcvt.s32.f32 %v341
      %v374 = vcvt.s32.f32 %v342
      %v375 = vcvt.s32.f32 %v343
      %v376 = vcvt.s32.f32 %v344
      %v377 = vcvt.s32.f32 %v345
      %v378 = vcvt.s32.f32 %v346
      %v379 = vcvt.s32.f32 %v347
      %v380 = vcvt.s32.f32 %v348
      %v381 = vcvt.s32.f32 %v349
      %v382 = vcvt.s32.f32 %v350
      %v383 = vcvt.s32.f32 %v351
      %v384 = vcvt.s32.f32 %v352
      %v385 = vcvt.s32.f32 %v353
      %v386 = vcvt.s32.f32 %v354
      %v387 = vcvt.s32.f32 %v355
      %v388 = vcvt.s32.f32 %v356
      %v389 = vcvt.s32.f32 %v357
      %v390 = vcvt.s32.f32 %v358
      %v391 = vcvt.s32.f32 %v359
      %v392 = vcvt.s32.f32 %v360
      %v393 = vadd.f32 %v361, 0.5
      %v394 = vadd.f32 %v362, 0.5
      %v395 = vadd.f32 %v363, 0.5
      %v396 = vadd.f32 %v364, 0.5
      %v397 = vadd.f32 %v365, 0.5
      %v398 = vadd.f32 %v366, 0.5
      %v399 = vadd.f32 %v367, 0.5
      %v400 = vadd.f32 %v368, 0.5
      %v401 = vadd.f32 %v369, 0.5
      %v402 = vadd.f32 %v370, 0.5
      %v403 = vadd.f32 %v371, 0.5
      %v404 = vadd.f32 %v372, 0.5
      %v405 = vadd.f32 %v373, 0.5
      %v406 = vadd.f32 %v374, 0.5
      %v407 = vadd.f32 %v375, 0.5
      %v408 = vadd.f32 %v376, 0.5
      %v409 = vadd.f32 %v377, 0.5
      %v410 = vadd.f32 %v378, 0.5
      %v411 = vadd.f32 %v379, 0.5
      %v412 = vadd.f32 %v380, 0.5
      %v413 = vadd.f32 %v381, 0.5
      %v414 = vadd.f32 %v382, 0.5
      %v415 = vadd.f32 %v383, 0.5
      %v416 = vadd.f32 %v384, 0.5
      %v417 = vadd.f32 %v385, 0.5
      %v418 = vadd.f32 %v386, 0.5
      %v419 = vadd.f32 %v387, 0.5
      %v420 = vadd.f32 %v388, 0.5
      %v421 = vadd.f32 %v389, 0.5
      %v422 = vadd.f32 %v390, 0.5
      %v423 = vadd.f32 %v391, 0.5
      %v424 = vadd.f32 %v392, 0.5
      %v425 = vmul.f32 %v393, 0.0625
      %v426 = vmul.f32 %v394, 0.0625
      %v427 = vmul.f32 %v395, 0.0625
      %v428 = vmul.f32 %v396, 0.0625
      %v429 = vmul.f32 %v397, 0.0625
      %v430 = vmul.f32 %v398, 0.0625
      %v431 = vmul.f32 %v399, 0.0625
      %v432 = vmul.f32 %v400, 0.0625
      %v433 = vmul.f32 %v401, 0.0625
      %v434 = vmul.f32 %v402, 0.0625
      %v435 = vmul.f32 %v403, 0.0625
      %v436 = vmul.f32 %v404, 0.0625
      %v437 = vmul.f32 %v405, 0.0625
      %v438 = vmul.f32 %v406, 0.0625
      %v439 = vmul.f32 %v407, 0.0625
      %v440 = vmul.f32 %v408, 0.0625
      %v441 = vmul.f32 %v409, 0.0625
      %v442 = vmul.f32 %v410, 0.0625
      %v443 = vmul.f32 %v411, 0.0625
      %v444 = vmul.f32 %v412, 0.0625
      %v445 = vmul.f32 %v413, 0.0625
      %v446 = vmul.f32 %v414, 0.0625
      %v447 = vmul.f32 %v415, 0.0625
      %v448 = vmul.f32 %v416, 0.0625
      %v449 = vmul.f32 %v417, 0.0625
      %v450 = vmul.f32 %v418, 0.0625
      %v451 = vmul.f32 %v419, 0.0625
      %v452 = vmul.f32 %v420, 0.0625
      %v453 = vmul.f32 %v421, 0.0625
      %v454 = vmul.f32 %v422, 0.0625
      %v455 = vmul.f32 %v423, 0.0625
      %v456 = vmul.f32 %v424, 0.0625
      %v457 = vfloor.f32 %v425
      %v458 = vfloor.f32 %v426
      %v459 = vfloor.f32 %v427
      %v460 = vfloor.f32 %v428
      %v461 = vfloor.f32 %v429
      %v462 = vfloor.f32 %v430
      %v463 = vfloor.f32 %v431
      %v464 = vfloor.f32 %v432
      %v465 = vfloor.f32 %v433
      %v466 = vfloor.f32 %v434
      %v467 = vfloor.f32 %v435
      %v468 = vfloor.f32 %v436
      %v469 = vfloor.f32 %v437
      %v470 = vfloor.f32 %v438
      %v471 = vfloor.f32 %v439
      %v472 = vfloor.f32 %v440
      %v473 = vfloor.f32 %v441
      %v474 = vfloor.f32 %v442
      %v475 = vfloor.f32 %v443
      %v476 = vfloor.f32 %v444
      %v477 = vfloor.f32 %v445
      %v478 = vfloor.f32 %v446
      %v479 = vfloor.f32 %v447
      %v480 = vfloor.f32 %v448
      %v481 = vfloor.f32 %v449
      %v482 = vfloor.f32 %v450
      %v483 = vfloor.f32 %v451
      %v484 = vfloor.f32 %v452
      %v485 = vfloor.f32 %v453
      %v486 = vfloor.f32 %v454
      %v487 = vfloor.f32 %v455
      %v488 = vfloor.f32 %v456
      %v489 = vmul.f32 %v457, 16.0
      %v490 = vmul.f32 %v458, 16.0
      %v491 = vmul.f32 %v459, 16.0
      %v492 = vmul.f32 %v460, 16.0
      %v493 = vmul.f32 %v461, 16.0
      %v494 = vmul.f32 %v462, 16.0
      %v495 = vmul.f32 %v463, 16.0
      %v496 = vmul.f32 %v464, 16.0
      %v497 = vmul.f32 %v465, 16.0
      %v498 = vmul.f32 %v466, 16.0
      %v499 = vmul.f32 %v467, 16.0
      %v500 = vmul.f32 %v468, 16.0
      %v501 = vmul.f32 %v469, 16.0
      %v502 = vmul.f32 %v470, 16.0
      %v503 = vmul.f32 %v471, 16.0
      %v504 = vmul.f32 %v472, 16.0
      %v505 = vmul.f32 %v473, 16.0
      %v506 = vmul.f32 %v474, 16.0
      %v507 = vmul.f32 %v475, 16.0
      %v508 = vmul.f32 %v476, 16.0
      %v509 = vmul.f32 %v477, 16.0
      %v510 = vmul.f32 %v478, 16.0
      %v511 = vmul.f32 %v479, 16.0
      %v512 = vmul.f32 %v480, 16.0
      %v513 = vmul.f32 %v481, 16.0
      %v514 = vmul.f32 %v482, 16.0
      %v515 = vmul.f32 %v483, 16.0
      %v516 = vmul.f32 %v484, 16.0
      %v517 = vmul.f32 %v485, 16.0
      %v518 = vmul.f32 %v486, 16.0
      %v519 = vmul.f32 %v487, 16.0
      %v520 = vmul.f32 %v488, 16.0
      %v521 = vsub.f32 %v361, %v489
      %v522 = vsub.f32 %v362, %v490
      %v523 = vsub.f32 %v363, %v491
      %v524 = vsub.f32 %v364, %v492
      %v525 = vsub.f32 %v365, %v493
      %v526 = vsub.f32 %v366, %v494
      %v527 = vsub.f32 %v367, %v495
      %v528 = vsub.f32 %v368, %v496
      %v529 = vsub.f32 %v369, %v497
      %v530 = vsub.f32 %v370, %v498
      %v531 = vsub.f32 %v371, %v499
      %v532 = vsub.f32 %v372, %v500
      %v533 = vsub.f32 %v373, %v501
      %v534 = vsub.f32 %v374, %v502
      %v535 = vsub.f32 %v375, %v503
      %v536 = vsub.f32 %v376, %v504
      %v537 = vsub.f32 %v377, %v505
      %v538 = vsub.f32 %v378, %v506
      %v539 = vsub.f32 %v379, %v507
      %v540 = vsub.f32 %v380, %v508
      %v541 = vsub.f32 %v381, %v509
      %v542 = vsub.f32 %v382, %v510
      %v543 = vsub.f32 %v383, %v511
      %v544 = vsub.f32 %v384, %v512
      %v545 = vsub.f32 %v385, %v513
      %v546 = vsub.f32 %v386, %v514
      %v547 = vsub.f32 %v387, %v515
      %v548 = vsub.f32 %v388, %v516
      %v549 = vsub.f32 %v389, %v517
      %v550 = vsub.f32 %v390, %v518
      %v551 = vsub.f32 %v391, %v519
      %v552 = vsub.f32 %v392, %v520
      %v553 = vld [vmem:[%s2] sm:$0x3f]
      %v554 = vld [vmem:[%s1] sm:$0xf]
      %v555 = vlaneseq
      %v556 = vshrl.u32 %v555, 7
      %v557 = vsub.s32 0, %v556
      %v558 = vrot.slane %v553, %v557
      %v591 = vunpack.c.l.b16 %v262
      %v592 = vunpack.c.l.b16 %v263
      %v593 = vunpack.c.l.b16 %v264
      %v594 = vunpack.c.l.b16 %v265
      %v595 = vunpack.c.l.b16 %v266
      %v596 = vunpack.c.l.b16 %v267
      %v597 = vunpack.c.l.b16 %v268
      %v598 = vunpack.c.l.b16 %v269
      %v599 = vunpack.c.l.b16 %v270
      %v600 = vunpack.c.l.b16 %v271
      %v601 = vunpack.c.l.b16 %v272
      %v602 = vunpack.c.l.b16 %v273
      %v603 = vunpack.c.l.b16 %v274
      %v604 = vunpack.c.l.b16 %v275
      %v605 = vunpack.c.l.b16 %v276
      %v606 = vunpack.c.l.b16 %v277
      %v607 = vunpack.c.l.b16 %v278
      %v608 = vunpack.c.l.b16 %v279
      %v609 = vunpack.c.l.b16 %v280
      %v610 = vunpack.c.l.b16 %v281
      %v611 = vunpack.c.l.b16 %v282
      %v612 = vunpack.c.l.b16 %v283
      %v613 = vunpack.c.l.b16 %v284
      %v614 = vunpack.c.l.b16 %v285
      %v615 = vunpack.c.l.b16 %v286
      %v616 = vunpack.c.l.b16 %v287
      %v617 = vunpack.c.l.b16 %v288
      %v618 = vunpack.c.l.b16 %v289
      %v619 = vunpack.c.l.b16 %v290
      %v620 = vunpack.c.l.b16 %v291
      %v621 = vunpack.c.l.b16 %v292
      %v622 = vunpack.c.l.b16 %v293
      %v623 = vpack.c.b16 %v592, %v591
      %v624 = vpack.c.b16 %v594, %v593
      %v625 = vpack.c.b16 %v596, %v595
      %v626 = vpack.c.b16 %v598, %v597
      %v627 = vpack.c.b16 %v600, %v599
      %v628 = vpack.c.b16 %v602, %v601
      %v629 = vpack.c.b16 %v604, %v603
      %v630 = vpack.c.b16 %v606, %v605
      %v631 = vpack.c.b16 %v608, %v607
      %v632 = vpack.c.b16 %v610, %v609
      %v633 = vpack.c.b16 %v612, %v611
      %v634 = vpack.c.b16 %v614, %v613
      %v635 = vpack.c.b16 %v616, %v615
      %v636 = vpack.c.b16 %v618, %v617
      %v637 = vpack.c.b16 %v620, %v619
      %v638 = vpack.c.b16 %v622, %v621
      %vm639 = vcmask 64512
      %v641 = vsel %vm639, %v623, 0
      %v644 = vsel %vm639, %v624, 0
      %v647 = vsel %vm639, %v625, 0
      %v650 = vsel %vm639, %v626, 0
      %v653 = vsel %vm639, %v627, 0
      %v656 = vsel %vm639, %v628, 0
      %v659 = vsel %vm639, %v629, 0
      %v662 = vsel %vm639, %v630, 0
      %v665 = vsel %vm639, %v631, 0
      %v668 = vsel %vm639, %v632, 0
      %v671 = vsel %vm639, %v633, 0
      %v674 = vsel %vm639, %v634, 0
      %v677 = vsel %vm639, %v635, 0
      %v680 = vsel %vm639, %v636, 0
      %v683 = vsel %vm639, %v637, 0
      %v686 = vsel %vm639, %v638, 0
      %vm688 = vcmask 1043456
      %v690 = vsel %vm688, %v554, 0
      %692 = vmatprep.subr.bf16.mxu0 0
      %693 = vmatpush1.bf16.msra.mxu0 %v690
      %694 = vmatprep.subr.bf16.mxu0 0
      %695 = vmatpush1.bf16.msra.mxu0 0
      %696 = vmatprep.subr.bf16.mxu0 0
      %697 = vmatpush1.bf16.msra.mxu0 0
      %698 = vmatprep.subr.bf16.mxu0 0
      %699 = vmatpush1.bf16.msra.mxu0 0
      %700 = vmatprep.subr.bf16.mxu0 0
      %701 = vmatpush1.bf16.msra.mxu0 0
      %702 = vmatprep.subr.bf16.mxu0 0
      %703 = vmatpush1.bf16.msra.mxu0 0
      %704 = vmatprep.subr.bf16.mxu0 0
      %705 = vmatpush1.bf16.msra.mxu0 0
      %706 = vmatprep.subr.bf16.mxu0 0
      %707 = vmatpush1.bf16.msra.mxu0 0
      %708 = vmatprep.subr.bf16.mxu0 0
      %709 = vmatpush1.bf16.msra.mxu0 0
      %710 = vmatprep.subr.bf16.mxu0 0
      %711 = vmatpush1.bf16.msra.mxu0 0
      %712 = vmatprep.subr.bf16.mxu0 0
      %713 = vmatpush1.bf16.msra.mxu0 0
      %714 = vmatprep.subr.bf16.mxu0 0
      %715 = vmatpush1.bf16.msra.mxu0 0
      %716 = vmatprep.subr.bf16.mxu0 0
      %717 = vmatpush1.bf16.msra.mxu0 0
      %718 = vmatprep.subr.bf16.mxu0 0
      %719 = vmatpush1.bf16.msra.mxu0 0
      %720 = vmatprep.subr.bf16.mxu0 0
      %721 = vmatpush1.bf16.msra.mxu0 0
      %722 = vmatprep.subr.bf16.mxu0 0
      %723 = vmatpush1.bf16.msra.mxu0 0
      %724 = vmatprep.mubr.bf16.mxu0 0
      %725 = vmatmul.mubr.bf16.gmra.mrb[0].mxu0 %v641
      %v726 = vpop.f32.mrb[0].mxu0
      %v727 = vadd.f32 %v558, %v726
      %v728 = vpop.f32.mrb[0].mxu0
      %v729 = vpop.f32.mrb[0].mxu0
      %v730 = vadd.f32 %v558, %v729
      %v731 = vpop.f32.mrb[0].mxu0
      %732 = vmatprep.mubr.bf16.mxu0 0
      %733 = vmatmul.mubr.bf16.gmra.mrb[0].mxu0 %v644
      %v734 = vpop.f32.mrb[0].mxu0
      %v735 = vadd.f32 %v558, %v734
      %v736 = vpop.f32.mrb[0].mxu0
      %v737 = vpop.f32.mrb[0].mxu0
      %v738 = vadd.f32 %v558, %v737
      %v739 = vpop.f32.mrb[0].mxu0
      %740 = vmatprep.mubr.bf16.mxu0 0
      %741 = vmatmul.mubr.bf16.gmra.mrb[0].mxu0 %v647
      %v742 = vpop.f32.mrb[0].mxu0
      %v743 = vadd.f32 %v558, %v742
      %v744 = vpop.f32.mrb[0].mxu0
      %v745 = vpop.f32.mrb[0].mxu0
      %v746 = vadd.f32 %v558, %v745
      %v747 = vpop.f32.mrb[0].mxu0
      %748 = vmatprep.mubr.bf16.mxu0 0
      %749 = vmatmul.mubr.bf16.gmra.mrb[0].mxu0 %v650
      %v750 = vpop.f32.mrb[0].mxu0
      %v751 = vadd.f32 %v558, %v750
      %v752 = vpop.f32.mrb[0].mxu0
      %v753 = vpop.f32.mrb[0].mxu0
      %v754 = vadd.f32 %v558, %v753
      %v755 = vpop.f32.mrb[0].mxu0
      %756 = vmatprep.mubr.bf16.mxu0 0
      %757 = vmatmul.mubr.bf16.gmra.mrb[0].mxu0 %v653
      %v758 = vpop.f32.mrb[0].mxu0
      %v759 = vadd.f32 %v558, %v758
      %v760 = vpop.f32.mrb[0].mxu0
      %v761 = vpop.f32.mrb[0].mxu0
      %v762 = vadd.f32 %v558, %v761
      %v763 = vpop.f32.mrb[0].mxu0
      %764 = vmatprep.mubr.bf16.mxu0 0
      %765 = vmatmul.mubr.bf16.gmra.mrb[0].mxu0 %v656
      %v766 = vpop.f32.mrb[0].mxu0
      %v767 = vadd.f32 %v558, %v766
      %v768 = vpop.f32.mrb[0].mxu0
      %v769 = vpop.f32.mrb[0].mxu0
      %v770 = vadd.f32 %v558, %v769
      %v771 = vpop.f32.mrb[0].mxu0
      %772 = vmatprep.mubr.bf16.mxu0 0
      %773 = vmatmul.mubr.bf16.gmra.mrb[0].mxu0 %v659
      %v774 = vpop.f32.mrb[0].mxu0
      %v775 = vadd.f32 %v558, %v774
      %v776 = vpop.f32.mrb[0].mxu0
      %v777 = vpop.f32.mrb[0].mxu0
      %v778 = vadd.f32 %v558, %v777
      %v779 = vpop.f32.mrb[0].mxu0
      %780 = vmatprep.mubr.bf16.mxu0 0
      %781 = vmatmul.mubr.bf16.gmra.mrb[0].mxu0 %v662
      %v782 = vpop.f32.mrb[0].mxu0
      %v783 = vadd.f32 %v558, %v782
      %v784 = vpop.f32.mrb[0].mxu0
      %v785 = vpop.f32.mrb[0].mxu0
      %v786 = vadd.f32 %v558, %v785
      %v787 = vpop.f32.mrb[0].mxu0
      %788 = vmatprep.mubr.bf16.mxu0 0
      %789 = vmatmul.mubr.bf16.gmra.mrb[0].mxu0 %v665
      %v790 = vpop.f32.mrb[0].mxu0
      %v791 = vadd.f32 %v558, %v790
      %v792 = vpop.f32.mrb[0].mxu0
      %v793 = vpop.f32.mrb[0].mxu0
      %v794 = vadd.f32 %v558, %v793
      %v795 = vpop.f32.mrb[0].mxu0
      %796 = vmatprep.mubr.bf16.mxu0 0
      %797 = vmatmul.mubr.bf16.gmra.mrb[0].mxu0 %v668
      %v798 = vpop.f32.mrb[0].mxu0
      %v799 = vadd.f32 %v558, %v798
      %v800 = vpop.f32.mrb[0].mxu0
      %v801 = vpop.f32.mrb[0].mxu0
      %v802 = vadd.f32 %v558, %v801
      %v803 = vpop.f32.mrb[0].mxu0
      %804 = vmatprep.mubr.bf16.mxu0 0
      %805 = vmatmul.mubr.bf16.gmra.mrb[0].mxu0 %v671
      %v806 = vpop.f32.mrb[0].mxu0
      %v807 = vadd.f32 %v558, %v806
      %v808 = vpop.f32.mrb[0].mxu0
      %v809 = vpop.f32.mrb[0].mxu0
      %v810 = vadd.f32 %v558, %v809
      %v811 = vpop.f32.mrb[0].mxu0
      %812 = vmatprep.mubr.bf16.mxu0 0
      %813 = vmatmul.mubr.bf16.gmra.mrb[0].mxu0 %v674
      %v814 = vpop.f32.mrb[0].mxu0
      %v815 = vadd.f32 %v558, %v814
      %v816 = vpop.f32.mrb[0].mxu0
      %v817 = vpop.f32.mrb[0].mxu0
      %v818 = vadd.f32 %v558, %v817
      %v819 = vpop.f32.mrb[0].mxu0
      %820 = vmatprep.mubr.bf16.mxu0 0
      %821 = vmatmul.mubr.bf16.gmra.mrb[0].mxu0 %v677
      %v822 = vpop.f32.mrb[0].mxu0
      %v823 = vadd.f32 %v558, %v822
      %v824 = vpop.f32.mrb[0].mxu0
      %v825 = vpop.f32.mrb[0].mxu0
      %v826 = vadd.f32 %v558, %v825
      %v827 = vpop.f32.mrb[0].mxu0
      %828 = vmatprep.mubr.bf16.mxu0 0
      %829 = vmatmul.mubr.bf16.gmra.mrb[0].mxu0 %v680
      %v830 = vpop.f32.mrb[0].mxu0
      %v831 = vadd.f32 %v558, %v830
      %v832 = vpop.f32.mrb[0].mxu0
      %v833 = vpop.f32.mrb[0].mxu0
      %v834 = vadd.f32 %v558, %v833
      %v835 = vpop.f32.mrb[0].mxu0
      %836 = vmatprep.mubr.bf16.mxu0 0
      %837 = vmatmul.mubr.bf16.gmra.mrb[0].mxu0 %v683
      %v838 = vpop.f32.mrb[0].mxu0
      %v839 = vadd.f32 %v558, %v838
      %v840 = vpop.f32.mrb[0].mxu0
      %v841 = vpop.f32.mrb[0].mxu0
      %v842 = vadd.f32 %v558, %v841
      %v843 = vpop.f32.mrb[0].mxu0
      %844 = vmatprep.mubr.bf16.mxu0 0
      %845 = vmatmul.mubr.bf16.gmra.mrb[0].mxu0 %v686
      %v846 = vpop.f32.mrb[0].mxu0
      %v847 = vadd.f32 %v558, %v846
      %v848 = vpop.f32.mrb[0].mxu0
      %v849 = vpop.f32.mrb[0].mxu0
      %v850 = vadd.f32 %v558, %v849
      %v851 = vpop.f32.mrb[0].mxu0
      %852 = vdwg.mxu0
      %vm853 = vcmask 695296
      %854 = vst.msk [vmem:[%s249] sm:$0xff] %vm853, %v727
      %855 = vst.msk [vmem:[%s249 + $0x8] sm:$0xff] %vm853, %v730
      %856 = vst.msk [vmem:[%s249 + $0x10] sm:$0xff] %vm853, %v735
      %857 = vst.msk [vmem:[%s249 + $0x18] sm:$0xff] %vm853, %v738
      %858 = vst.msk [vmem:[%s249 + $0x20] sm:$0xff] %vm853, %v743
      %859 = vst.msk [vmem:[%s249 + $0x28] sm:$0xff] %vm853, %v746
      %860 = vst.msk [vmem:[%s249 + $0x30] sm:$0xff] %vm853, %v751
      %861 = vst.msk [vmem:[%s249 + $0x38] sm:$0xff] %vm853, %v754
      %862 = vst.msk [vmem:[%s249 + $0x40] sm:$0xff] %vm853, %v759
      %863 = vst.msk [vmem:[%s249 + $0x48] sm:$0xff] %vm853, %v762
      %864 = vst.msk [vmem:[%s249 + $0x50] sm:$0xff] %vm853, %v767
      %865 = vst.msk [vmem:[%s249 + $0x58] sm:$0xff] %vm853, %v770
      %866 = vst.msk [vmem:[%s249 + $0x60] sm:$0xff] %vm853, %v775
      %867 = vst.msk [vmem:[%s249 + $0x68] sm:$0xff] %vm853, %v778
      %868 = vst.msk [vmem:[%s249 + $0x70] sm:$0xff] %vm853, %v783
      %869 = vst.msk [vmem:[%s249 + $0x78] sm:$0xff] %vm853, %v786
      %870 = vst.msk [vmem:[%s249 + $0x80] sm:$0xff] %vm853, %v791
      %871 = vst.msk [vmem:[%s249 + $0x88] sm:$0xff] %vm853, %v794
      %872 = vst.msk [vmem:[%s249 + $0x90] sm:$0xff] %vm853, %v799
      %873 = vst.msk [vmem:[%s249 + $0x98] sm:$0xff] %vm853, %v802
      %874 = vst.msk [vmem:[%s249 + $0xa0] sm:$0xff] %vm853, %v807
      %875 = vst.msk [vmem:[%s249 + $0xa8] sm:$0xff] %vm853, %v810
      %876 = vst.msk [vmem:[%s249 + $0xb0] sm:$0xff] %vm853, %v815
      %877 = vst.msk [vmem:[%s249 + $0xb8] sm:$0xff] %vm853, %v818
      %878 = vst.msk [vmem:[%s249 + $0xc0] sm:$0xff] %vm853, %v823
      %879 = vst.msk [vmem:[%s249 + $0xc8] sm:$0xff] %vm853, %v826
      %880 = vst.msk [vmem:[%s249 + $0xd0] sm:$0xff] %vm853, %v831
      %881 = vst.msk [vmem:[%s249 + $0xd8] sm:$0xff] %vm853, %v834
      %882 = vst.msk [vmem:[%s249 + $0xe0] sm:$0xff] %vm853, %v839
      %883 = vst.msk [vmem:[%s249 + $0xe8] sm:$0xff] %vm853, %v842
      %884 = vst.msk [vmem:[%s249 + $0xf0] sm:$0xff] %vm853, %v847
      %885 = vst.msk [vmem:[%s249 + $0xf8] sm:$0xff] %vm853, %v850
      %v886 = vmul.f32 %v727, 0.5
      %v887 = vmul.f32 %v730, 0.5
      %v888 = vmul.f32 %v735, 0.5
      %v889 = vmul.f32 %v738, 0.5
      %v890 = vmul.f32 %v743, 0.5
      %v891 = vmul.f32 %v746, 0.5
      %v892 = vmul.f32 %v751, 0.5
      %v893 = vmul.f32 %v754, 0.5
      %v894 = vmul.f32 %v759, 0.5
      %v895 = vmul.f32 %v762, 0.5
      %v896 = vmul.f32 %v767, 0.5
      %v897 = vmul.f32 %v770, 0.5
      %v898 = vmul.f32 %v775, 0.5
      %v899 = vmul.f32 %v778, 0.5
      %v900 = vmul.f32 %v783, 0.5
      %v901 = vmul.f32 %v786, 0.5
      %v902 = vmul.f32 %v791, 0.5
      %v903 = vmul.f32 %v794, 0.5
      %v904 = vmul.f32 %v799, 0.5
      %v905 = vmul.f32 %v802, 0.5
      %v906 = vmul.f32 %v807, 0.5
      %v907 = vmul.f32 %v810, 0.5
      %v908 = vmul.f32 %v815, 0.5
      %v909 = vmul.f32 %v818, 0.5
      %v910 = vmul.f32 %v823, 0.5
      %v911 = vmul.f32 %v826, 0.5
      %v912 = vmul.f32 %v831, 0.5
      %v913 = vmul.f32 %v834, 0.5
      %v914 = vmul.f32 %v839, 0.5
      %v915 = vmul.f32 %v842, 0.5
      %v916 = vmul.f32 %v847, 0.5
      %v917 = vmul.f32 %v850, 0.5
      %v918 = vtanh.pop %v886
      %v919 = vtanh.pop %v887
      %v920 = vtanh.pop %v888
      %v921 = vtanh.pop %v889
      %v922 = vtanh.pop %v890
      %v923 = vtanh.pop %v891
      %v924 = vtanh.pop %v892
      %v925 = vtanh.pop %v893
      %v926 = vtanh.pop %v894
      %v927 = vtanh.pop %v895
      %v928 = vtanh.pop %v896
      %v929 = vtanh.pop %v897
      %v930 = vtanh.pop %v898
      %v931 = vtanh.pop %v899
      %v932 = vtanh.pop %v900
      %v933 = vtanh.pop %v901
      %v934 = vtanh.pop %v902
      %v935 = vtanh.pop %v903
      %v936 = vtanh.pop %v904
      %v937 = vtanh.pop %v905
      %v938 = vtanh.pop %v906
      %v939 = vtanh.pop %v907
      %v940 = vtanh.pop %v908
      %v941 = vtanh.pop %v909
      %v942 = vtanh.pop %v910
      %v943 = vtanh.pop %v911
      %v944 = vtanh.pop %v912
      %v945 = vtanh.pop %v913
      %v946 = vtanh.pop %v914
      %v947 = vtanh.pop %v915
      %v948 = vtanh.pop %v916
      %v949 = vtanh.pop %v917
      %v950 = vmul.f32 %v918, 0.5
      %v951 = vmul.f32 %v919, 0.5
      %v952 = vmul.f32 %v920, 0.5
      %v953 = vmul.f32 %v921, 0.5
      %v954 = vmul.f32 %v922, 0.5
      %v955 = vmul.f32 %v923, 0.5
      %v956 = vmul.f32 %v924, 0.5
      %v957 = vmul.f32 %v925, 0.5
      %v958 = vmul.f32 %v926, 0.5
      %v959 = vmul.f32 %v927, 0.5
      %v960 = vmul.f32 %v928, 0.5
      %v961 = vmul.f32 %v929, 0.5
      %v962 = vmul.f32 %v930, 0.5
      %v963 = vmul.f32 %v931, 0.5
      %v964 = vmul.f32 %v932, 0.5
      %v965 = vmul.f32 %v933, 0.5
      %v966 = vmul.f32 %v934, 0.5
      %v967 = vmul.f32 %v935, 0.5
      %v968 = vmul.f32 %v936, 0.5
      %v969 = vmul.f32 %v937, 0.5
      %v970 = vmul.f32 %v938, 0.5
      %v971 = vmul.f32 %v939, 0.5
      %v972 = vmul.f32 %v940, 0.5
      %v973 = vmul.f32 %v941, 0.5
      %v974 = vmul.f32 %v942, 0.5
      %v975 = vmul.f32 %v943, 0.5
      %v976 = vmul.f32 %v944, 0.5
      %v977 = vmul.f32 %v945, 0.5
      %v978 = vmul.f32 %v946, 0.5
      %v979 = vmul.f32 %v947, 0.5
      %v980 = vmul.f32 %v948, 0.5
      %v981 = vmul.f32 %v949, 0.5
      %v982 = vadd.f32 %v950, 0.5
      %v983 = vadd.f32 %v951, 0.5
      %v984 = vadd.f32 %v952, 0.5
      %v985 = vadd.f32 %v953, 0.5
      %v986 = vadd.f32 %v954, 0.5
      %v987 = vadd.f32 %v955, 0.5
      %v988 = vadd.f32 %v956, 0.5
      %v989 = vadd.f32 %v957, 0.5
      %v990 = vadd.f32 %v958, 0.5
      %v991 = vadd.f32 %v959, 0.5
      %v992 = vadd.f32 %v960, 0.5
      %v993 = vadd.f32 %v961, 0.5
      %v994 = vadd.f32 %v962, 0.5
      %v995 = vadd.f32 %v963, 0.5
      %v996 = vadd.f32 %v964, 0.5
      %v997 = vadd.f32 %v965, 0.5
      %v998 = vadd.f32 %v966, 0.5
      %v999 = vadd.f32 %v967, 0.5
      %v1000 = vadd.f32 %v968, 0.5
      %v1001 = vadd.f32 %v969, 0.5
      %v1002 = vadd.f32 %v970, 0.5
      %v1003 = vadd.f32 %v971, 0.5
      %v1004 = vadd.f32 %v972, 0.5
      %v1005 = vadd.f32 %v973, 0.5
      %v1006 = vadd.f32 %v974, 0.5
      %v1007 = vadd.f32 %v975, 0.5
      %v1008 = vadd.f32 %v976, 0.5
      %v1009 = vadd.f32 %v977, 0.5
      %v1010 = vadd.f32 %v978, 0.5
      %v1011 = vadd.f32 %v979, 0.5
      %v1012 = vadd.f32 %v980, 0.5
      %v1013 = vadd.f32 %v981, 0.5
      %v1014 = vlaneseq
      %v1015 = vshrl.u32 %v1014, 7
      %v1016 = vsub.s32 3, %v1015
      %v1017 = vrot.slane %v553, %v1016
      %v1018 = vmul.f32 %v521, %v1017
      %v1019 = vmul.f32 %v522, %v1017
      %v1020 = vmul.f32 %v523, %v1017
      %v1021 = vmul.f32 %v524, %v1017
      %v1022 = vmul.f32 %v525, %v1017
      %v1023 = vmul.f32 %v526, %v1017
      %v1024 = vmul.f32 %v527, %v1017
      %v1025 = vmul.f32 %v528, %v1017
      %v1026 = vmul.f32 %v529, %v1017
      %v1027 = vmul.f32 %v530, %v1017
      %v1028 = vmul.f32 %v531, %v1017
      %v1029 = vmul.f32 %v532, %v1017
      %v1030 = vmul.f32 %v533, %v1017
      %v1031 = vmul.f32 %v534, %v1017
      %v1032 = vmul.f32 %v535, %v1017
      %v1033 = vmul.f32 %v536, %v1017
      %v1034 = vmul.f32 %v537, %v1017
      %v1035 = vmul.f32 %v538, %v1017
      %v1036 = vmul.f32 %v539, %v1017
      %v1037 = vmul.f32 %v540, %v1017
      %v1038 = vmul.f32 %v541, %v1017
      %v1039 = vmul.f32 %v542, %v1017
      %v1040 = vmul.f32 %v543, %v1017
      %v1041 = vmul.f32 %v544, %v1017
      %v1042 = vmul.f32 %v545, %v1017
      %v1043 = vmul.f32 %v546, %v1017
      %v1044 = vmul.f32 %v547, %v1017
      %v1045 = vmul.f32 %v548, %v1017
      %v1046 = vmul.f32 %v549, %v1017
      %v1047 = vmul.f32 %v550, %v1017
      %v1048 = vmul.f32 %v551, %v1017
      %v1049 = vmul.f32 %v552, %v1017
      %v1050 = vlaneseq
      %v1051 = vshrl.u32 %v1050, 7
      %v1052 = vsub.s32 4, %v1051
      %v1053 = vrot.slane %v553, %v1052
      %v1054 = vmul.f32 %v457, %v1053
      %v1055 = vmul.f32 %v458, %v1053
      %v1056 = vmul.f32 %v459, %v1053
      %v1057 = vmul.f32 %v460, %v1053
      %v1058 = vmul.f32 %v461, %v1053
      %v1059 = vmul.f32 %v462, %v1053
      %v1060 = vmul.f32 %v463, %v1053
      %v1061 = vmul.f32 %v464, %v1053
      %v1062 = vmul.f32 %v465, %v1053
      %v1063 = vmul.f32 %v466, %v1053
      %v1064 = vmul.f32 %v467, %v1053
      %v1065 = vmul.f32 %v468, %v1053
      %v1066 = vmul.f32 %v469, %v1053
      %v1067 = vmul.f32 %v470, %v1053
      %v1068 = vmul.f32 %v471, %v1053
      %v1069 = vmul.f32 %v472, %v1053
      %v1070 = vmul.f32 %v473, %v1053
      %v1071 = vmul.f32 %v474, %v1053
      %v1072 = vmul.f32 %v475, %v1053
      %v1073 = vmul.f32 %v476, %v1053
      %v1074 = vmul.f32 %v477, %v1053
      %v1075 = vmul.f32 %v478, %v1053
      %v1076 = vmul.f32 %v479, %v1053
      %v1077 = vmul.f32 %v480, %v1053
      %v1078 = vmul.f32 %v481, %v1053
      %v1079 = vmul.f32 %v482, %v1053
      %v1080 = vmul.f32 %v483, %v1053
      %v1081 = vmul.f32 %v484, %v1053
      %v1082 = vmul.f32 %v485, %v1053
      %v1083 = vmul.f32 %v486, %v1053
      %v1084 = vmul.f32 %v487, %v1053
      %v1085 = vmul.f32 %v488, %v1053
      %v1086 = vadd.f32 %v1018, %v1054
      %v1087 = vadd.f32 %v1019, %v1055
      %v1088 = vadd.f32 %v1020, %v1056
      %v1089 = vadd.f32 %v1021, %v1057
      %v1090 = vadd.f32 %v1022, %v1058
      %v1091 = vadd.f32 %v1023, %v1059
      %v1092 = vadd.f32 %v1024, %v1060
      %v1093 = vadd.f32 %v1025, %v1061
      %v1094 = vadd.f32 %v1026, %v1062
      %v1095 = vadd.f32 %v1027, %v1063
      %v1096 = vadd.f32 %v1028, %v1064
      %v1097 = vadd.f32 %v1029, %v1065
      %v1098 = vadd.f32 %v1030, %v1066
      %v1099 = vadd.f32 %v1031, %v1067
      %v1100 = vadd.f32 %v1032, %v1068
      %v1101 = vadd.f32 %v1033, %v1069
      %v1102 = vadd.f32 %v1034, %v1070
      %v1103 = vadd.f32 %v1035, %v1071
      %v1104 = vadd.f32 %v1036, %v1072
      %v1105 = vadd.f32 %v1037, %v1073
      %v1106 = vadd.f32 %v1038, %v1074
      %v1107 = vadd.f32 %v1039, %v1075
      %v1108 = vadd.f32 %v1040, %v1076
      %v1109 = vadd.f32 %v1041, %v1077
      %v1110 = vadd.f32 %v1042, %v1078
      %v1111 = vadd.f32 %v1043, %v1079
      %v1112 = vadd.f32 %v1044, %v1080
      %v1113 = vadd.f32 %v1045, %v1081
      %v1114 = vadd.f32 %v1046, %v1082
      %v1115 = vadd.f32 %v1047, %v1083
      %v1116 = vadd.f32 %v1048, %v1084
      %v1117 = vadd.f32 %v1049, %v1085
      %v1118 = vlaneseq
      %v1119 = vshrl.u32 %v1118, 7
      %v1120 = vsub.s32 5, %v1119
      %v1121 = vrot.slane %v553, %v1120
      %v1122 = vadd.f32 %v1086, %v1121
      %v1123 = vadd.f32 %v1087, %v1121
      %v1124 = vadd.f32 %v1088, %v1121
      %v1125 = vadd.f32 %v1089, %v1121
      %v1126 = vadd.f32 %v1090, %v1121
      %v1127 = vadd.f32 %v1091, %v1121
      %v1128 = vadd.f32 %v1092, %v1121
      %v1129 = vadd.f32 %v1093, %v1121
      %v1130 = vadd.f32 %v1094, %v1121
      %v1131 = vadd.f32 %v1095, %v1121
      %v1132 = vadd.f32 %v1096, %v1121
      %v1133 = vadd.f32 %v1097, %v1121
      %v1134 = vadd.f32 %v1098, %v1121
      %v1135 = vadd.f32 %v1099, %v1121
      %v1136 = vadd.f32 %v1100, %v1121
      %v1137 = vadd.f32 %v1101, %v1121
      %v1138 = vadd.f32 %v1102, %v1121
      %v1139 = vadd.f32 %v1103, %v1121
      %v1140 = vadd.f32 %v1104, %v1121
      %v1141 = vadd.f32 %v1105, %v1121
      %v1142 = vadd.f32 %v1106, %v1121
      %v1143 = vadd.f32 %v1107, %v1121
      %v1144 = vadd.f32 %v1108, %v1121
      %v1145 = vadd.f32 %v1109, %v1121
      %v1146 = vadd.f32 %v1110, %v1121
      %v1147 = vadd.f32 %v1111, %v1121
      %v1148 = vadd.f32 %v1112, %v1121
      %v1149 = vadd.f32 %v1113, %v1121
      %v1150 = vadd.f32 %v1114, %v1121
      %v1151 = vadd.f32 %v1115, %v1121
      %v1152 = vadd.f32 %v1116, %v1121
      %v1153 = vadd.f32 %v1117, %v1121
      %v1154 = vlaneseq
      %v1155 = vshrl.u32 %v1154, 7
      %v1156 = vsub.s32 2, %v1155
      %v1157 = vrot.slane %v553, %v1156
      %v1158 = vmul.f32 %v1157, %v982
      %v1159 = vmul.f32 %v1157, %v983
      %v1160 = vmul.f32 %v1157, %v984
      %v1161 = vmul.f32 %v1157, %v985
      %v1162 = vmul.f32 %v1157, %v986
      %v1163 = vmul.f32 %v1157, %v987
      %v1164 = vmul.f32 %v1157, %v988
      %v1165 = vmul.f32 %v1157, %v989
      %v1166 = vmul.f32 %v1157, %v990
      %v1167 = vmul.f32 %v1157, %v991
      %v1168 = vmul.f32 %v1157, %v992
      %v1169 = vmul.f32 %v1157, %v993
      %v1170 = vmul.f32 %v1157, %v994
      %v1171 = vmul.f32 %v1157, %v995
      %v1172 = vmul.f32 %v1157, %v996
      %v1173 = vmul.f32 %v1157, %v997
      %v1174 = vmul.f32 %v1157, %v998
      %v1175 = vmul.f32 %v1157, %v999
      %v1176 = vmul.f32 %v1157, %v1000
      %v1177 = vmul.f32 %v1157, %v1001
      %v1178 = vmul.f32 %v1157, %v1002
      %v1179 = vmul.f32 %v1157, %v1003
      %v1180 = vmul.f32 %v1157, %v1004
      %v1181 = vmul.f32 %v1157, %v1005
      %v1182 = vmul.f32 %v1157, %v1006
      %v1183 = vmul.f32 %v1157, %v1007
      %v1184 = vmul.f32 %v1157, %v1008
      %v1185 = vmul.f32 %v1157, %v1009
      %v1186 = vmul.f32 %v1157, %v1010
      %v1187 = vmul.f32 %v1157, %v1011
      %v1188 = vmul.f32 %v1157, %v1012
      %v1189 = vmul.f32 %v1157, %v1013
      %v1190 = vsub.f32 1.0, %v553
      %v1191 = vlaneseq
      %v1192 = vshrl.u32 %v1191, 7
      %v1193 = vsub.s32 2, %v1192
      %v1194 = vrot.slane %v1190, %v1193
      %v1195 = vadd.f32 %v1158, %v1194
      %v1196 = vadd.f32 %v1159, %v1194
      %v1197 = vadd.f32 %v1160, %v1194
      %v1198 = vadd.f32 %v1161, %v1194
      %v1199 = vadd.f32 %v1162, %v1194
      %v1200 = vadd.f32 %v1163, %v1194
      %v1201 = vadd.f32 %v1164, %v1194
      %v1202 = vadd.f32 %v1165, %v1194
      %v1203 = vadd.f32 %v1166, %v1194
      %v1204 = vadd.f32 %v1167, %v1194
      %v1205 = vadd.f32 %v1168, %v1194
      %v1206 = vadd.f32 %v1169, %v1194
      %v1207 = vadd.f32 %v1170, %v1194
      %v1208 = vadd.f32 %v1171, %v1194
      %v1209 = vadd.f32 %v1172, %v1194
      %v1210 = vadd.f32 %v1173, %v1194
      %v1211 = vadd.f32 %v1174, %v1194
      %v1212 = vadd.f32 %v1175, %v1194
      %v1213 = vadd.f32 %v1176, %v1194
      %v1214 = vadd.f32 %v1177, %v1194
      %v1215 = vadd.f32 %v1178, %v1194
      %v1216 = vadd.f32 %v1179, %v1194
      %v1217 = vadd.f32 %v1180, %v1194
      %v1218 = vadd.f32 %v1181, %v1194
      %v1219 = vadd.f32 %v1182, %v1194
      %v1220 = vadd.f32 %v1183, %v1194
      %v1221 = vadd.f32 %v1184, %v1194
      %v1222 = vadd.f32 %v1185, %v1194
      %v1223 = vadd.f32 %v1186, %v1194
      %v1224 = vadd.f32 %v1187, %v1194
      %v1225 = vadd.f32 %v1188, %v1194
      %v1226 = vadd.f32 %v1189, %v1194
      %v1227 = vlaneseq
      %v1228 = vshrl.u32 %v1227, 7
      %v1229 = vsub.s32 1, %v1228
      %v1230 = vrot.slane %v553, %v1229
      %v1231 = vmul.f32 %v982, %v1230
      %v1232 = vmul.f32 %v983, %v1230
      %v1233 = vmul.f32 %v984, %v1230
      %v1234 = vmul.f32 %v985, %v1230
      %v1235 = vmul.f32 %v986, %v1230
      %v1236 = vmul.f32 %v987, %v1230
      %v1237 = vmul.f32 %v988, %v1230
      %v1238 = vmul.f32 %v989, %v1230
      %v1239 = vmul.f32 %v990, %v1230
      %v1240 = vmul.f32 %v991, %v1230
      %v1241 = vmul.f32 %v992, %v1230
      %v1242 = vmul.f32 %v993, %v1230
      %v1243 = vmul.f32 %v994, %v1230
      %v1244 = vmul.f32 %v995, %v1230
      %v1245 = vmul.f32 %v996, %v1230
      %v1246 = vmul.f32 %v997, %v1230
      %v1247 = vmul.f32 %v998, %v1230
      %v1248 = vmul.f32 %v999, %v1230
      %v1249 = vmul.f32 %v1000, %v1230
      %v1250 = vmul.f32 %v1001, %v1230
      %v1251 = vmul.f32 %v1002, %v1230
      %v1252 = vmul.f32 %v1003, %v1230
      %v1253 = vmul.f32 %v1004, %v1230
      %v1254 = vmul.f32 %v1005, %v1230
      %v1255 = vmul.f32 %v1006, %v1230
      %v1256 = vmul.f32 %v1007, %v1230
      %v1257 = vmul.f32 %v1008, %v1230
      %v1258 = vmul.f32 %v1009, %v1230
      %v1259 = vmul.f32 %v1010, %v1230
      %v1260 = vmul.f32 %v1011, %v1230
      %v1261 = vmul.f32 %v1012, %v1230
      %v1262 = vmul.f32 %v1013, %v1230
      %v1263 = vmul.f32 %v1231, %v1195
      %v1264 = vmul.f32 %v1232, %v1196
      %v1265 = vmul.f32 %v1233, %v1197
      %v1266 = vmul.f32 %v1234, %v1198
      %v1267 = vmul.f32 %v1235, %v1199
      %v1268 = vmul.f32 %v1236, %v1200
      %v1269 = vmul.f32 %v1237, %v1201
      %v1270 = vmul.f32 %v1238, %v1202
      %v1271 = vmul.f32 %v1239, %v1203
      %v1272 = vmul.f32 %v1240, %v1204
      %v1273 = vmul.f32 %v1241, %v1205
      %v1274 = vmul.f32 %v1242, %v1206
      %v1275 = vmul.f32 %v1243, %v1207
      %v1276 = vmul.f32 %v1244, %v1208
      %v1277 = vmul.f32 %v1245, %v1209
      %v1278 = vmul.f32 %v1246, %v1210
      %v1279 = vmul.f32 %v1247, %v1211
      %v1280 = vmul.f32 %v1248, %v1212
      %v1281 = vmul.f32 %v1249, %v1213
      %v1282 = vmul.f32 %v1250, %v1214
      %v1283 = vmul.f32 %v1251, %v1215
      %v1284 = vmul.f32 %v1252, %v1216
      %v1285 = vmul.f32 %v1253, %v1217
      %v1286 = vmul.f32 %v1254, %v1218
      %v1287 = vmul.f32 %v1255, %v1219
      %v1288 = vmul.f32 %v1256, %v1220
      %v1289 = vmul.f32 %v1257, %v1221
      %v1290 = vmul.f32 %v1258, %v1222
      %v1291 = vmul.f32 %v1259, %v1223
      %v1292 = vmul.f32 %v1260, %v1224
      %v1293 = vmul.f32 %v1261, %v1225
      %v1294 = vmul.f32 %v1262, %v1226
      %v1295 = vadd.f32 %v1263, %v1122
      %v1296 = vadd.f32 %v1264, %v1123
      %v1297 = vadd.f32 %v1265, %v1124
      %v1298 = vadd.f32 %v1266, %v1125
      %v1299 = vadd.f32 %v1267, %v1126
      %v1300 = vadd.f32 %v1268, %v1127
      %v1301 = vadd.f32 %v1269, %v1128
      %v1302 = vadd.f32 %v1270, %v1129
      %v1303 = vadd.f32 %v1271, %v1130
      %v1304 = vadd.f32 %v1272, %v1131
      %v1305 = vadd.f32 %v1273, %v1132
      %v1306 = vadd.f32 %v1274, %v1133
      %v1307 = vadd.f32 %v1275, %v1134
      %v1308 = vadd.f32 %v1276, %v1135
      %v1309 = vadd.f32 %v1277, %v1136
      %v1310 = vadd.f32 %v1278, %v1137
      %v1311 = vadd.f32 %v1279, %v1138
      %v1312 = vadd.f32 %v1280, %v1139
      %v1313 = vadd.f32 %v1281, %v1140
      %v1314 = vadd.f32 %v1282, %v1141
      %v1315 = vadd.f32 %v1283, %v1142
      %v1316 = vadd.f32 %v1284, %v1143
      %v1317 = vadd.f32 %v1285, %v1144
      %v1318 = vadd.f32 %v1286, %v1145
      %v1319 = vadd.f32 %v1287, %v1146
      %v1320 = vadd.f32 %v1288, %v1147
      %v1321 = vadd.f32 %v1289, %v1148
      %v1322 = vadd.f32 %v1290, %v1149
      %v1323 = vadd.f32 %v1291, %v1150
      %v1324 = vadd.f32 %v1292, %v1151
      %v1325 = vadd.f32 %v1293, %v1152
      %v1326 = vadd.f32 %v1294, %v1153
      %1327 = vst.msk [vmem:[%s259] sm:$0xff] %vm853, %v1295
      %1328 = vst.msk [vmem:[%s259 + $0x8] sm:$0xff] %vm853, %v1296
      %1329 = vst.msk [vmem:[%s259 + $0x10] sm:$0xff] %vm853, %v1297
      %1330 = vst.msk [vmem:[%s259 + $0x18] sm:$0xff] %vm853, %v1298
      %1331 = vst.msk [vmem:[%s259 + $0x20] sm:$0xff] %vm853, %v1299
      %1332 = vst.msk [vmem:[%s259 + $0x28] sm:$0xff] %vm853, %v1300
      %1333 = vst.msk [vmem:[%s259 + $0x30] sm:$0xff] %vm853, %v1301
      %1334 = vst.msk [vmem:[%s259 + $0x38] sm:$0xff] %vm853, %v1302
      %1335 = vst.msk [vmem:[%s259 + $0x40] sm:$0xff] %vm853, %v1303
      %1336 = vst.msk [vmem:[%s259 + $0x48] sm:$0xff] %vm853, %v1304
      %1337 = vst.msk [vmem:[%s259 + $0x50] sm:$0xff] %vm853, %v1305
      %1338 = vst.msk [vmem:[%s259 + $0x58] sm:$0xff] %vm853, %v1306
      %1339 = vst.msk [vmem:[%s259 + $0x60] sm:$0xff] %vm853, %v1307
      %1340 = vst.msk [vmem:[%s259 + $0x68] sm:$0xff] %vm853, %v1308
      %1341 = vst.msk [vmem:[%s259 + $0x70] sm:$0xff] %vm853, %v1309
      %1342 = vst.msk [vmem:[%s259 + $0x78] sm:$0xff] %vm853, %v1310
      %1343 = vst.msk [vmem:[%s259 + $0x80] sm:$0xff] %vm853, %v1311
      %1344 = vst.msk [vmem:[%s259 + $0x88] sm:$0xff] %vm853, %v1312
      %1345 = vst.msk [vmem:[%s259 + $0x90] sm:$0xff] %vm853, %v1313
      %1346 = vst.msk [vmem:[%s259 + $0x98] sm:$0xff] %vm853, %v1314
      %1347 = vst.msk [vmem:[%s259 + $0xa0] sm:$0xff] %vm853, %v1315
      %1348 = vst.msk [vmem:[%s259 + $0xa8] sm:$0xff] %vm853, %v1316
      %1349 = vst.msk [vmem:[%s259 + $0xb0] sm:$0xff] %vm853, %v1317
      %1350 = vst.msk [vmem:[%s259 + $0xb8] sm:$0xff] %vm853, %v1318
      %1351 = vst.msk [vmem:[%s259 + $0xc0] sm:$0xff] %vm853, %v1319
      %1352 = vst.msk [vmem:[%s259 + $0xc8] sm:$0xff] %vm853, %v1320
      %1353 = vst.msk [vmem:[%s259 + $0xd0] sm:$0xff] %vm853, %v1321
      %1354 = vst.msk [vmem:[%s259 + $0xd8] sm:$0xff] %vm853, %v1322
      %1355 = vst.msk [vmem:[%s259 + $0xe0] sm:$0xff] %vm853, %v1323
      %1356 = vst.msk [vmem:[%s259 + $0xe8] sm:$0xff] %vm853, %v1324
      %1357 = vst.msk [vmem:[%s259 + $0xf0] sm:$0xff] %vm853, %v1325
      %1358 = vst.msk [vmem:[%s259 + $0xf8] sm:$0xff] %vm853, %v1326
      %s1359 = scalar_lea.vmem %s2, 8
      %v1360 = vld [vmem:[%s1359] sm:$0x3f]
      %s1361 = scalar_lea.vmem %s1, 4
      %v1362 = vld [vmem:[%s1361] sm:$0xf]
      %v1363 = vlaneseq
      %v1364 = vshrl.u32 %v1363, 7
      %v1365 = vsub.s32 0, %v1364
      %v1366 = vrot.slane %v1360, %v1365
      %v1368 = vsel %vm688, %v1362, 0
      %1370 = vmatprep.subr.bf16.mxu0 0
      %1371 = vmatpush1.bf16.msra.mxu0 %v1368
      %1372 = vmatprep.subr.bf16.mxu0 0
      %1373 = vmatpush1.bf16.msra.mxu0 0
      %1374 = vmatprep.subr.bf16.mxu0 0
      %1375 = vmatpush1.bf16.msra.mxu0 0
      %1376 = vmatprep.subr.bf16.mxu0 0
      %1377 = vmatpush1.bf16.msra.mxu0 0
      %1378 = vmatprep.subr.bf16.mxu0 0
      %1379 = vmatpush1.bf16.msra.mxu0 0
      %1380 = vmatprep.subr.bf16.mxu0 0
      %1381 = vmatpush1.bf16.msra.mxu0 0
      %1382 = vmatprep.subr.bf16.mxu0 0
      %1383 = vmatpush1.bf16.msra.mxu0 0
      %1384 = vmatprep.subr.bf16.mxu0 0
      %1385 = vmatpush1.bf16.msra.mxu0 0
      %1386 = vmatprep.subr.bf16.mxu0 0
      %1387 = vmatpush1.bf16.msra.mxu0 0
      %1388 = vmatprep.subr.bf16.mxu0 0
      %1389 = vmatpush1.bf16.msra.mxu0 0
      %1390 = vmatprep.subr.bf16.mxu0 0
      %1391 = vmatpush1.bf16.msra.mxu0 0
      %1392 = vmatprep.subr.bf16.mxu0 0
      %1393 = vmatpush1.bf16.msra.mxu0 0
      %1394 = vmatprep.subr.bf16.mxu0 0
      %1395 = vmatpush1.bf16.msra.mxu0 0
      %1396 = vmatprep.subr.bf16.mxu0 0
      %1397 = vmatpush1.bf16.msra.mxu0 0
      %1398 = vmatprep.subr.bf16.mxu0 0
      %1399 = vmatpush1.bf16.msra.mxu0 0
      %1400 = vmatprep.subr.bf16.mxu0 0
      %1401 = vmatpush1.bf16.msra.mxu0 0
      %1402 = vmatprep.mubr.bf16.mxu0 0
      %1403 = vmatmul.mubr.bf16.gmra.mrb[0].mxu0 %v641
      %v1404 = vpop.f32.mrb[0].mxu0
      %v1405 = vadd.f32 %v1366, %v1404
      %v1406 = vpop.f32.mrb[0].mxu0
      %v1407 = vpop.f32.mrb[0].mxu0
      %v1408 = vadd.f32 %v1366, %v1407
      %v1409 = vpop.f32.mrb[0].mxu0
      %1410 = vmatprep.mubr.bf16.mxu0 0
      %1411 = vmatmul.mubr.bf16.gmra.mrb[0].mxu0 %v644
      %v1412 = vpop.f32.mrb[0].mxu0
      %v1413 = vadd.f32 %v1366, %v1412
      %v1414 = vpop.f32.mrb[0].mxu0
      %v1415 = vpop.f32.mrb[0].mxu0
      %v1416 = vadd.f32 %v1366, %v1415
      %v1417 = vpop.f32.mrb[0].mxu0
      %1418 = vmatprep.mubr.bf16.mxu0 0
      %1419 = vmatmul.mubr.bf16.gmra.mrb[0].mxu0 %v647
      %v1420 = vpop.f32.mrb[0].mxu0
      %v1421 = vadd.f32 %v1366, %v1420
      %v1422 = vpop.f32.mrb[0].mxu0
      %v1423 = vpop.f32.mrb[0].mxu0
      %v1424 = vadd.f32 %v1366, %v1423
      %v1425 = vpop.f32.mrb[0].mxu0
      %1426 = vmatprep.mubr.bf16.mxu0 0
      %1427 = vmatmul.mubr.bf16.gmra.mrb[0].mxu0 %v650
      %v1428 = vpop.f32.mrb[0].mxu0
      %v1429 = vadd.f32 %v1366, %v1428
      %v1430 = vpop.f32.mrb[0].mxu0
      %v1431 = vpop.f32.mrb[0].mxu0
      %v1432 = vadd.f32 %v1366, %v1431
      %v1433 = vpop.f32.mrb[0].mxu0
      %1434 = vmatprep.mubr.bf16.mxu0 0
      %1435 = vmatmul.mubr.bf16.gmra.mrb[0].mxu0 %v653
      %v1436 = vpop.f32.mrb[0].mxu0
      %v1437 = vadd.f32 %v1366, %v1436
      %v1438 = vpop.f32.mrb[0].mxu0
      %v1439 = vpop.f32.mrb[0].mxu0
      %v1440 = vadd.f32 %v1366, %v1439
      %v1441 = vpop.f32.mrb[0].mxu0
      %1442 = vmatprep.mubr.bf16.mxu0 0
      %1443 = vmatmul.mubr.bf16.gmra.mrb[0].mxu0 %v656
      %v1444 = vpop.f32.mrb[0].mxu0
      %v1445 = vadd.f32 %v1366, %v1444
      %v1446 = vpop.f32.mrb[0].mxu0
      %v1447 = vpop.f32.mrb[0].mxu0
      %v1448 = vadd.f32 %v1366, %v1447
      %v1449 = vpop.f32.mrb[0].mxu0
      %1450 = vmatprep.mubr.bf16.mxu0 0
      %1451 = vmatmul.mubr.bf16.gmra.mrb[0].mxu0 %v659
      %v1452 = vpop.f32.mrb[0].mxu0
      %v1453 = vadd.f32 %v1366, %v1452
      %v1454 = vpop.f32.mrb[0].mxu0
      %v1455 = vpop.f32.mrb[0].mxu0
      %v1456 = vadd.f32 %v1366, %v1455
      %v1457 = vpop.f32.mrb[0].mxu0
      %1458 = vmatprep.mubr.bf16.mxu0 0
      %1459 = vmatmul.mubr.bf16.gmra.mrb[0].mxu0 %v662
      %v1460 = vpop.f32.mrb[0].mxu0
      %v1461 = vadd.f32 %v1366, %v1460
      %v1462 = vpop.f32.mrb[0].mxu0
      %v1463 = vpop.f32.mrb[0].mxu0
      %v1464 = vadd.f32 %v1366, %v1463
      %v1465 = vpop.f32.mrb[0].mxu0
      %1466 = vmatprep.mubr.bf16.mxu0 0
      %1467 = vmatmul.mubr.bf16.gmra.mrb[0].mxu0 %v665
      %v1468 = vpop.f32.mrb[0].mxu0
      %v1469 = vadd.f32 %v1366, %v1468
      %v1470 = vpop.f32.mrb[0].mxu0
      %v1471 = vpop.f32.mrb[0].mxu0
      %v1472 = vadd.f32 %v1366, %v1471
      %v1473 = vpop.f32.mrb[0].mxu0
      %1474 = vmatprep.mubr.bf16.mxu0 0
      %1475 = vmatmul.mubr.bf16.gmra.mrb[0].mxu0 %v668
      %v1476 = vpop.f32.mrb[0].mxu0
      %v1477 = vadd.f32 %v1366, %v1476
      %v1478 = vpop.f32.mrb[0].mxu0
      %v1479 = vpop.f32.mrb[0].mxu0
      %v1480 = vadd.f32 %v1366, %v1479
      %v1481 = vpop.f32.mrb[0].mxu0
      %1482 = vmatprep.mubr.bf16.mxu0 0
      %1483 = vmatmul.mubr.bf16.gmra.mrb[0].mxu0 %v671
      %v1484 = vpop.f32.mrb[0].mxu0
      %v1485 = vadd.f32 %v1366, %v1484
      %v1486 = vpop.f32.mrb[0].mxu0
      %v1487 = vpop.f32.mrb[0].mxu0
      %v1488 = vadd.f32 %v1366, %v1487
      %v1489 = vpop.f32.mrb[0].mxu0
      %1490 = vmatprep.mubr.bf16.mxu0 0
      %1491 = vmatmul.mubr.bf16.gmra.mrb[0].mxu0 %v674
      %v1492 = vpop.f32.mrb[0].mxu0
      %v1493 = vadd.f32 %v1366, %v1492
      %v1494 = vpop.f32.mrb[0].mxu0
      %v1495 = vpop.f32.mrb[0].mxu0
      %v1496 = vadd.f32 %v1366, %v1495
      %v1497 = vpop.f32.mrb[0].mxu0
      %1498 = vmatprep.mubr.bf16.mxu0 0
      %1499 = vmatmul.mubr.bf16.gmra.mrb[0].mxu0 %v677
      %v1500 = vpop.f32.mrb[0].mxu0
      %v1501 = vadd.f32 %v1366, %v1500
      %v1502 = vpop.f32.mrb[0].mxu0
      %v1503 = vpop.f32.mrb[0].mxu0
      %v1504 = vadd.f32 %v1366, %v1503
      %v1505 = vpop.f32.mrb[0].mxu0
      %1506 = vmatprep.mubr.bf16.mxu0 0
      %1507 = vmatmul.mubr.bf16.gmra.mrb[0].mxu0 %v680
      %v1508 = vpop.f32.mrb[0].mxu0
      %v1509 = vadd.f32 %v1366, %v1508
      %v1510 = vpop.f32.mrb[0].mxu0
      %v1511 = vpop.f32.mrb[0].mxu0
      %v1512 = vadd.f32 %v1366, %v1511
      %v1513 = vpop.f32.mrb[0].mxu0
      %1514 = vmatprep.mubr.bf16.mxu0 0
      %1515 = vmatmul.mubr.bf16.gmra.mrb[0].mxu0 %v683
      %v1516 = vpop.f32.mrb[0].mxu0
      %v1517 = vadd.f32 %v1366, %v1516
      %v1518 = vpop.f32.mrb[0].mxu0
      %v1519 = vpop.f32.mrb[0].mxu0
      %v1520 = vadd.f32 %v1366, %v1519
      %v1521 = vpop.f32.mrb[0].mxu0
      %1522 = vmatprep.mubr.bf16.mxu0 0
      %1523 = vmatmul.mubr.bf16.gmra.mrb[0].mxu0 %v686
      %v1524 = vpop.f32.mrb[0].mxu0
      %v1525 = vadd.f32 %v1366, %v1524
      %v1526 = vpop.f32.mrb[0].mxu0
      %v1527 = vpop.f32.mrb[0].mxu0
      %v1528 = vadd.f32 %v1366, %v1527
      %v1529 = vpop.f32.mrb[0].mxu0
      %1530 = vdwg.mxu0
      %s1531 = scalar_lea.vmem %s249, 256
      %1532 = vst.msk [vmem:[%s1531] sm:$0xff] %vm853, %v1405
      %1533 = vst.msk [vmem:[%s1531 + $0x8] sm:$0xff] %vm853, %v1408
      %1534 = vst.msk [vmem:[%s1531 + $0x10] sm:$0xff] %vm853, %v1413
      %1535 = vst.msk [vmem:[%s1531 + $0x18] sm:$0xff] %vm853, %v1416
      %1536 = vst.msk [vmem:[%s1531 + $0x20] sm:$0xff] %vm853, %v1421
      %1537 = vst.msk [vmem:[%s1531 + $0x28] sm:$0xff] %vm853, %v1424
      %1538 = vst.msk [vmem:[%s1531 + $0x30] sm:$0xff] %vm853, %v1429
      %1539 = vst.msk [vmem:[%s1531 + $0x38] sm:$0xff] %vm853, %v1432
      %1540 = vst.msk [vmem:[%s1531 + $0x40] sm:$0xff] %vm853, %v1437
      %1541 = vst.msk [vmem:[%s1531 + $0x48] sm:$0xff] %vm853, %v1440
      %1542 = vst.msk [vmem:[%s1531 + $0x50] sm:$0xff] %vm853, %v1445
      %1543 = vst.msk [vmem:[%s1531 + $0x58] sm:$0xff] %vm853, %v1448
      %1544 = vst.msk [vmem:[%s1531 + $0x60] sm:$0xff] %vm853, %v1453
      %1545 = vst.msk [vmem:[%s1531 + $0x68] sm:$0xff] %vm853, %v1456
      %1546 = vst.msk [vmem:[%s1531 + $0x70] sm:$0xff] %vm853, %v1461
      %1547 = vst.msk [vmem:[%s1531 + $0x78] sm:$0xff] %vm853, %v1464
      %1548 = vst.msk [vmem:[%s1531 + $0x80] sm:$0xff] %vm853, %v1469
      %1549 = vst.msk [vmem:[%s1531 + $0x88] sm:$0xff] %vm853, %v1472
      %1550 = vst.msk [vmem:[%s1531 + $0x90] sm:$0xff] %vm853, %v1477
      %1551 = vst.msk [vmem:[%s1531 + $0x98] sm:$0xff] %vm853, %v1480
      %1552 = vst.msk [vmem:[%s1531 + $0xa0] sm:$0xff] %vm853, %v1485
      %1553 = vst.msk [vmem:[%s1531 + $0xa8] sm:$0xff] %vm853, %v1488
      %1554 = vst.msk [vmem:[%s1531 + $0xb0] sm:$0xff] %vm853, %v1493
      %1555 = vst.msk [vmem:[%s1531 + $0xb8] sm:$0xff] %vm853, %v1496
      %1556 = vst.msk [vmem:[%s1531 + $0xc0] sm:$0xff] %vm853, %v1501
      %1557 = vst.msk [vmem:[%s1531 + $0xc8] sm:$0xff] %vm853, %v1504
      %1558 = vst.msk [vmem:[%s1531 + $0xd0] sm:$0xff] %vm853, %v1509
      %1559 = vst.msk [vmem:[%s1531 + $0xd8] sm:$0xff] %vm853, %v1512
      %1560 = vst.msk [vmem:[%s1531 + $0xe0] sm:$0xff] %vm853, %v1517
      %1561 = vst.msk [vmem:[%s1531 + $0xe8] sm:$0xff] %vm853, %v1520
      %1562 = vst.msk [vmem:[%s1531 + $0xf0] sm:$0xff] %vm853, %v1525
      %1563 = vst.msk [vmem:[%s1531 + $0xf8] sm:$0xff] %vm853, %v1528
      %v1564 = vmul.f32 %v1405, 0.5
      %v1565 = vmul.f32 %v1408, 0.5
      %v1566 = vmul.f32 %v1413, 0.5
      %v1567 = vmul.f32 %v1416, 0.5
      %v1568 = vmul.f32 %v1421, 0.5
      %v1569 = vmul.f32 %v1424, 0.5
      %v1570 = vmul.f32 %v1429, 0.5
      %v1571 = vmul.f32 %v1432, 0.5
      %v1572 = vmul.f32 %v1437, 0.5
      %v1573 = vmul.f32 %v1440, 0.5
      %v1574 = vmul.f32 %v1445, 0.5
      %v1575 = vmul.f32 %v1448, 0.5
      %v1576 = vmul.f32 %v1453, 0.5
      %v1577 = vmul.f32 %v1456, 0.5
      %v1578 = vmul.f32 %v1461, 0.5
      %v1579 = vmul.f32 %v1464, 0.5
      %v1580 = vmul.f32 %v1469, 0.5
      %v1581 = vmul.f32 %v1472, 0.5
      %v1582 = vmul.f32 %v1477, 0.5
      %v1583 = vmul.f32 %v1480, 0.5
      %v1584 = vmul.f32 %v1485, 0.5
      %v1585 = vmul.f32 %v1488, 0.5
      %v1586 = vmul.f32 %v1493, 0.5
      %v1587 = vmul.f32 %v1496, 0.5
      %v1588 = vmul.f32 %v1501, 0.5
      %v1589 = vmul.f32 %v1504, 0.5
      %v1590 = vmul.f32 %v1509, 0.5
      %v1591 = vmul.f32 %v1512, 0.5
      %v1592 = vmul.f32 %v1517, 0.5
      %v1593 = vmul.f32 %v1520, 0.5
      %v1594 = vmul.f32 %v1525, 0.5
      %v1595 = vmul.f32 %v1528, 0.5
      %v1596 = vtanh.pop %v1564
      %v1597 = vtanh.pop %v1565
      %v1598 = vtanh.pop %v1566
      %v1599 = vtanh.pop %v1567
      %v1600 = vtanh.pop %v1568
      %v1601 = vtanh.pop %v1569
      %v1602 = vtanh.pop %v1570
      %v1603 = vtanh.pop %v1571
      %v1604 = vtanh.pop %v1572
      %v1605 = vtanh.pop %v1573
      %v1606 = vtanh.pop %v1574
      %v1607 = vtanh.pop %v1575
      %v1608 = vtanh.pop %v1576
      %v1609 = vtanh.pop %v1577
      %v1610 = vtanh.pop %v1578
      %v1611 = vtanh.pop %v1579
      %v1612 = vtanh.pop %v1580
      %v1613 = vtanh.pop %v1581
      %v1614 = vtanh.pop %v1582
      %v1615 = vtanh.pop %v1583
      %v1616 = vtanh.pop %v1584
      %v1617 = vtanh.pop %v1585
      %v1618 = vtanh.pop %v1586
      %v1619 = vtanh.pop %v1587
      %v1620 = vtanh.pop %v1588
      %v1621 = vtanh.pop %v1589
      %v1622 = vtanh.pop %v1590
      %v1623 = vtanh.pop %v1591
      %v1624 = vtanh.pop %v1592
      %v1625 = vtanh.pop %v1593
      %v1626 = vtanh.pop %v1594
      %v1627 = vtanh.pop %v1595
      %v1628 = vmul.f32 %v1596, 0.5
      %v1629 = vmul.f32 %v1597, 0.5
      %v1630 = vmul.f32 %v1598, 0.5
      %v1631 = vmul.f32 %v1599, 0.5
      %v1632 = vmul.f32 %v1600, 0.5
      %v1633 = vmul.f32 %v1601, 0.5
      %v1634 = vmul.f32 %v1602, 0.5
      %v1635 = vmul.f32 %v1603, 0.5
      %v1636 = vmul.f32 %v1604, 0.5
      %v1637 = vmul.f32 %v1605, 0.5
      %v1638 = vmul.f32 %v1606, 0.5
      %v1639 = vmul.f32 %v1607, 0.5
      %v1640 = vmul.f32 %v1608, 0.5
      %v1641 = vmul.f32 %v1609, 0.5
      %v1642 = vmul.f32 %v1610, 0.5
      %v1643 = vmul.f32 %v1611, 0.5
      %v1644 = vmul.f32 %v1612, 0.5
      %v1645 = vmul.f32 %v1613, 0.5
      %v1646 = vmul.f32 %v1614, 0.5
      %v1647 = vmul.f32 %v1615, 0.5
      %v1648 = vmul.f32 %v1616, 0.5
      %v1649 = vmul.f32 %v1617, 0.5
      %v1650 = vmul.f32 %v1618, 0.5
      %v1651 = vmul.f32 %v1619, 0.5
      %v1652 = vmul.f32 %v1620, 0.5
      %v1653 = vmul.f32 %v1621, 0.5
      %v1654 = vmul.f32 %v1622, 0.5
      %v1655 = vmul.f32 %v1623, 0.5
      %v1656 = vmul.f32 %v1624, 0.5
      %v1657 = vmul.f32 %v1625, 0.5
      %v1658 = vmul.f32 %v1626, 0.5
      %v1659 = vmul.f32 %v1627, 0.5
      %v1660 = vadd.f32 %v1628, 0.5
      %v1661 = vadd.f32 %v1629, 0.5
      %v1662 = vadd.f32 %v1630, 0.5
      %v1663 = vadd.f32 %v1631, 0.5
      %v1664 = vadd.f32 %v1632, 0.5
      %v1665 = vadd.f32 %v1633, 0.5
      %v1666 = vadd.f32 %v1634, 0.5
      %v1667 = vadd.f32 %v1635, 0.5
      %v1668 = vadd.f32 %v1636, 0.5
      %v1669 = vadd.f32 %v1637, 0.5
      %v1670 = vadd.f32 %v1638, 0.5
      %v1671 = vadd.f32 %v1639, 0.5
      %v1672 = vadd.f32 %v1640, 0.5
      %v1673 = vadd.f32 %v1641, 0.5
      %v1674 = vadd.f32 %v1642, 0.5
      %v1675 = vadd.f32 %v1643, 0.5
      %v1676 = vadd.f32 %v1644, 0.5
      %v1677 = vadd.f32 %v1645, 0.5
      %v1678 = vadd.f32 %v1646, 0.5
      %v1679 = vadd.f32 %v1647, 0.5
      %v1680 = vadd.f32 %v1648, 0.5
      %v1681 = vadd.f32 %v1649, 0.5
      %v1682 = vadd.f32 %v1650, 0.5
      %v1683 = vadd.f32 %v1651, 0.5
      %v1684 = vadd.f32 %v1652, 0.5
      %v1685 = vadd.f32 %v1653, 0.5
      %v1686 = vadd.f32 %v1654, 0.5
      %v1687 = vadd.f32 %v1655, 0.5
      %v1688 = vadd.f32 %v1656, 0.5
      %v1689 = vadd.f32 %v1657, 0.5
      %v1690 = vadd.f32 %v1658, 0.5
      %v1691 = vadd.f32 %v1659, 0.5
      %v1692 = vlaneseq
      %v1693 = vshrl.u32 %v1692, 7
      %v1694 = vsub.s32 3, %v1693
      %v1695 = vrot.slane %v1360, %v1694
      %v1696 = vmul.f32 %v521, %v1695
      %v1697 = vmul.f32 %v522, %v1695
      %v1698 = vmul.f32 %v523, %v1695
      %v1699 = vmul.f32 %v524, %v1695
      %v1700 = vmul.f32 %v525, %v1695
      %v1701 = vmul.f32 %v526, %v1695
      %v1702 = vmul.f32 %v527, %v1695
      %v1703 = vmul.f32 %v528, %v1695
      %v1704 = vmul.f32 %v529, %v1695
      %v1705 = vmul.f32 %v530, %v1695
      %v1706 = vmul.f32 %v531, %v1695
      %v1707 = vmul.f32 %v532, %v1695
      %v1708 = vmul.f32 %v533, %v1695
      %v1709 = vmul.f32 %v534, %v1695
      %v1710 = vmul.f32 %v535, %v1695
      %v1711 = vmul.f32 %v536, %v1695
      %v1712 = vmul.f32 %v537, %v1695
      %v1713 = vmul.f32 %v538, %v1695
      %v1714 = vmul.f32 %v539, %v1695
      %v1715 = vmul.f32 %v540, %v1695
      %v1716 = vmul.f32 %v541, %v1695
      %v1717 = vmul.f32 %v542, %v1695
      %v1718 = vmul.f32 %v543, %v1695
      %v1719 = vmul.f32 %v544, %v1695
      %v1720 = vmul.f32 %v545, %v1695
      %v1721 = vmul.f32 %v546, %v1695
      %v1722 = vmul.f32 %v547, %v1695
      %v1723 = vmul.f32 %v548, %v1695
      %v1724 = vmul.f32 %v549, %v1695
      %v1725 = vmul.f32 %v550, %v1695
      %v1726 = vmul.f32 %v551, %v1695
      %v1727 = vmul.f32 %v552, %v1695
      %v1728 = vlaneseq
      %v1729 = vshrl.u32 %v1728, 7
      %v1730 = vsub.s32 4, %v1729
      %v1731 = vrot.slane %v1360, %v1730
      %v1732 = vmul.f32 %v457, %v1731
      %v1733 = vmul.f32 %v458, %v1731
      %v1734 = vmul.f32 %v459, %v1731
      %v1735 = vmul.f32 %v460, %v1731
      %v1736 = vmul.f32 %v461, %v1731
      %v1737 = vmul.f32 %v462, %v1731
      %v1738 = vmul.f32 %v463, %v1731
      %v1739 = vmul.f32 %v464, %v1731
      %v1740 = vmul.f32 %v465, %v1731
      %v1741 = vmul.f32 %v466, %v1731
      %v1742 = vmul.f32 %v467, %v1731
      %v1743 = vmul.f32 %v468, %v1731
      %v1744 = vmul.f32 %v469, %v1731
      %v1745 = vmul.f32 %v470, %v1731
      %v1746 = vmul.f32 %v471, %v1731
      %v1747 = vmul.f32 %v472, %v1731
      %v1748 = vmul.f32 %v473, %v1731
      %v1749 = vmul.f32 %v474, %v1731
      %v1750 = vmul.f32 %v475, %v1731
      %v1751 = vmul.f32 %v476, %v1731
      %v1752 = vmul.f32 %v477, %v1731
      %v1753 = vmul.f32 %v478, %v1731
      %v1754 = vmul.f32 %v479, %v1731
      %v1755 = vmul.f32 %v480, %v1731
      %v1756 = vmul.f32 %v481, %v1731
      %v1757 = vmul.f32 %v482, %v1731
      %v1758 = vmul.f32 %v483, %v1731
      %v1759 = vmul.f32 %v484, %v1731
      %v1760 = vmul.f32 %v485, %v1731
      %v1761 = vmul.f32 %v486, %v1731
      %v1762 = vmul.f32 %v487, %v1731
      %v1763 = vmul.f32 %v488, %v1731
      %v1764 = vadd.f32 %v1696, %v1732
      %v1765 = vadd.f32 %v1697, %v1733
      %v1766 = vadd.f32 %v1698, %v1734
      %v1767 = vadd.f32 %v1699, %v1735
      %v1768 = vadd.f32 %v1700, %v1736
      %v1769 = vadd.f32 %v1701, %v1737
      %v1770 = vadd.f32 %v1702, %v1738
      %v1771 = vadd.f32 %v1703, %v1739
      %v1772 = vadd.f32 %v1704, %v1740
      %v1773 = vadd.f32 %v1705, %v1741
      %v1774 = vadd.f32 %v1706, %v1742
      %v1775 = vadd.f32 %v1707, %v1743
      %v1776 = vadd.f32 %v1708, %v1744
      %v1777 = vadd.f32 %v1709, %v1745
      %v1778 = vadd.f32 %v1710, %v1746
      %v1779 = vadd.f32 %v1711, %v1747
      %v1780 = vadd.f32 %v1712, %v1748
      %v1781 = vadd.f32 %v1713, %v1749
      %v1782 = vadd.f32 %v1714, %v1750
      %v1783 = vadd.f32 %v1715, %v1751
      %v1784 = vadd.f32 %v1716, %v1752
      %v1785 = vadd.f32 %v1717, %v1753
      %v1786 = vadd.f32 %v1718, %v1754
      %v1787 = vadd.f32 %v1719, %v1755
      %v1788 = vadd.f32 %v1720, %v1756
      %v1789 = vadd.f32 %v1721, %v1757
      %v1790 = vadd.f32 %v1722, %v1758
      %v1791 = vadd.f32 %v1723, %v1759
      %v1792 = vadd.f32 %v1724, %v1760
      %v1793 = vadd.f32 %v1725, %v1761
      %v1794 = vadd.f32 %v1726, %v1762
      %v1795 = vadd.f32 %v1727, %v1763
      %v1796 = vlaneseq
      %v1797 = vshrl.u32 %v1796, 7
      %v1798 = vsub.s32 5, %v1797
      %v1799 = vrot.slane %v1360, %v1798
      %v1800 = vadd.f32 %v1764, %v1799
      %v1801 = vadd.f32 %v1765, %v1799
      %v1802 = vadd.f32 %v1766, %v1799
      %v1803 = vadd.f32 %v1767, %v1799
      %v1804 = vadd.f32 %v1768, %v1799
      %v1805 = vadd.f32 %v1769, %v1799
      %v1806 = vadd.f32 %v1770, %v1799
      %v1807 = vadd.f32 %v1771, %v1799
      %v1808 = vadd.f32 %v1772, %v1799
      %v1809 = vadd.f32 %v1773, %v1799
      %v1810 = vadd.f32 %v1774, %v1799
      %v1811 = vadd.f32 %v1775, %v1799
      %v1812 = vadd.f32 %v1776, %v1799
      %v1813 = vadd.f32 %v1777, %v1799
      %v1814 = vadd.f32 %v1778, %v1799
      %v1815 = vadd.f32 %v1779, %v1799
      %v1816 = vadd.f32 %v1780, %v1799
      %v1817 = vadd.f32 %v1781, %v1799
      %v1818 = vadd.f32 %v1782, %v1799
      %v1819 = vadd.f32 %v1783, %v1799
      %v1820 = vadd.f32 %v1784, %v1799
      %v1821 = vadd.f32 %v1785, %v1799
      %v1822 = vadd.f32 %v1786, %v1799
      %v1823 = vadd.f32 %v1787, %v1799
      %v1824 = vadd.f32 %v1788, %v1799
      %v1825 = vadd.f32 %v1789, %v1799
      %v1826 = vadd.f32 %v1790, %v1799
      %v1827 = vadd.f32 %v1791, %v1799
      %v1828 = vadd.f32 %v1792, %v1799
      %v1829 = vadd.f32 %v1793, %v1799
      %v1830 = vadd.f32 %v1794, %v1799
      %v1831 = vadd.f32 %v1795, %v1799
      %v1832 = vlaneseq
      %v1833 = vshrl.u32 %v1832, 7
      %v1834 = vsub.s32 2, %v1833
      %v1835 = vrot.slane %v1360, %v1834
      %v1836 = vmul.f32 %v1835, %v1660
      %v1837 = vmul.f32 %v1835, %v1661
      %v1838 = vmul.f32 %v1835, %v1662
      %v1839 = vmul.f32 %v1835, %v1663
      %v1840 = vmul.f32 %v1835, %v1664
      %v1841 = vmul.f32 %v1835, %v1665
      %v1842 = vmul.f32 %v1835, %v1666
      %v1843 = vmul.f32 %v1835, %v1667
      %v1844 = vmul.f32 %v1835, %v1668
      %v1845 = vmul.f32 %v1835, %v1669
      %v1846 = vmul.f32 %v1835, %v1670
      %v1847 = vmul.f32 %v1835, %v1671
      %v1848 = vmul.f32 %v1835, %v1672
      %v1849 = vmul.f32 %v1835, %v1673
      %v1850 = vmul.f32 %v1835, %v1674
      %v1851 = vmul.f32 %v1835, %v1675
      %v1852 = vmul.f32 %v1835, %v1676
      %v1853 = vmul.f32 %v1835, %v1677
      %v1854 = vmul.f32 %v1835, %v1678
      %v1855 = vmul.f32 %v1835, %v1679
      %v1856 = vmul.f32 %v1835, %v1680
      %v1857 = vmul.f32 %v1835, %v1681
      %v1858 = vmul.f32 %v1835, %v1682
      %v1859 = vmul.f32 %v1835, %v1683
      %v1860 = vmul.f32 %v1835, %v1684
      %v1861 = vmul.f32 %v1835, %v1685
      %v1862 = vmul.f32 %v1835, %v1686
      %v1863 = vmul.f32 %v1835, %v1687
      %v1864 = vmul.f32 %v1835, %v1688
      %v1865 = vmul.f32 %v1835, %v1689
      %v1866 = vmul.f32 %v1835, %v1690
      %v1867 = vmul.f32 %v1835, %v1691
      %v1868 = vsub.f32 1.0, %v1360
      %v1869 = vlaneseq
      %v1870 = vshrl.u32 %v1869, 7
      %v1871 = vsub.s32 2, %v1870
      %v1872 = vrot.slane %v1868, %v1871
      %v1873 = vadd.f32 %v1836, %v1872
      %v1874 = vadd.f32 %v1837, %v1872
      %v1875 = vadd.f32 %v1838, %v1872
      %v1876 = vadd.f32 %v1839, %v1872
      %v1877 = vadd.f32 %v1840, %v1872
      %v1878 = vadd.f32 %v1841, %v1872
      %v1879 = vadd.f32 %v1842, %v1872
      %v1880 = vadd.f32 %v1843, %v1872
      %v1881 = vadd.f32 %v1844, %v1872
      %v1882 = vadd.f32 %v1845, %v1872
      %v1883 = vadd.f32 %v1846, %v1872
      %v1884 = vadd.f32 %v1847, %v1872
      %v1885 = vadd.f32 %v1848, %v1872
      %v1886 = vadd.f32 %v1849, %v1872
      %v1887 = vadd.f32 %v1850, %v1872
      %v1888 = vadd.f32 %v1851, %v1872
      %v1889 = vadd.f32 %v1852, %v1872
      %v1890 = vadd.f32 %v1853, %v1872
      %v1891 = vadd.f32 %v1854, %v1872
      %v1892 = vadd.f32 %v1855, %v1872
      %v1893 = vadd.f32 %v1856, %v1872
      %v1894 = vadd.f32 %v1857, %v1872
      %v1895 = vadd.f32 %v1858, %v1872
      %v1896 = vadd.f32 %v1859, %v1872
      %v1897 = vadd.f32 %v1860, %v1872
      %v1898 = vadd.f32 %v1861, %v1872
      %v1899 = vadd.f32 %v1862, %v1872
      %v1900 = vadd.f32 %v1863, %v1872
      %v1901 = vadd.f32 %v1864, %v1872
      %v1902 = vadd.f32 %v1865, %v1872
      %v1903 = vadd.f32 %v1866, %v1872
      %v1904 = vadd.f32 %v1867, %v1872
      %v1905 = vlaneseq
      %v1906 = vshrl.u32 %v1905, 7
      %v1907 = vsub.s32 1, %v1906
      %v1908 = vrot.slane %v1360, %v1907
      %v1909 = vmul.f32 %v1660, %v1908
      %v1910 = vmul.f32 %v1661, %v1908
      %v1911 = vmul.f32 %v1662, %v1908
      %v1912 = vmul.f32 %v1663, %v1908
      %v1913 = vmul.f32 %v1664, %v1908
      %v1914 = vmul.f32 %v1665, %v1908
      %v1915 = vmul.f32 %v1666, %v1908
      %v1916 = vmul.f32 %v1667, %v1908
      %v1917 = vmul.f32 %v1668, %v1908
      %v1918 = vmul.f32 %v1669, %v1908
      %v1919 = vmul.f32 %v1670, %v1908
      %v1920 = vmul.f32 %v1671, %v1908
      %v1921 = vmul.f32 %v1672, %v1908
      %v1922 = vmul.f32 %v1673, %v1908
      %v1923 = vmul.f32 %v1674, %v1908
      %v1924 = vmul.f32 %v1675, %v1908
      %v1925 = vmul.f32 %v1676, %v1908
      %v1926 = vmul.f32 %v1677, %v1908
      %v1927 = vmul.f32 %v1678, %v1908
      %v1928 = vmul.f32 %v1679, %v1908
      %v1929 = vmul.f32 %v1680, %v1908
      %v1930 = vmul.f32 %v1681, %v1908
      %v1931 = vmul.f32 %v1682, %v1908
      %v1932 = vmul.f32 %v1683, %v1908
      %v1933 = vmul.f32 %v1684, %v1908
      %v1934 = vmul.f32 %v1685, %v1908
      %v1935 = vmul.f32 %v1686, %v1908
      %v1936 = vmul.f32 %v1687, %v1908
      %v1937 = vmul.f32 %v1688, %v1908
      %v1938 = vmul.f32 %v1689, %v1908
      %v1939 = vmul.f32 %v1690, %v1908
      %v1940 = vmul.f32 %v1691, %v1908
      %v1941 = vmul.f32 %v1909, %v1873
      %v1942 = vmul.f32 %v1910, %v1874
      %v1943 = vmul.f32 %v1911, %v1875
      %v1944 = vmul.f32 %v1912, %v1876
      %v1945 = vmul.f32 %v1913, %v1877
      %v1946 = vmul.f32 %v1914, %v1878
      %v1947 = vmul.f32 %v1915, %v1879
      %v1948 = vmul.f32 %v1916, %v1880
      %v1949 = vmul.f32 %v1917, %v1881
      %v1950 = vmul.f32 %v1918, %v1882
      %v1951 = vmul.f32 %v1919, %v1883
      %v1952 = vmul.f32 %v1920, %v1884
      %v1953 = vmul.f32 %v1921, %v1885
      %v1954 = vmul.f32 %v1922, %v1886
      %v1955 = vmul.f32 %v1923, %v1887
      %v1956 = vmul.f32 %v1924, %v1888
      %v1957 = vmul.f32 %v1925, %v1889
      %v1958 = vmul.f32 %v1926, %v1890
      %v1959 = vmul.f32 %v1927, %v1891
      %v1960 = vmul.f32 %v1928, %v1892
      %v1961 = vmul.f32 %v1929, %v1893
      %v1962 = vmul.f32 %v1930, %v1894
      %v1963 = vmul.f32 %v1931, %v1895
      %v1964 = vmul.f32 %v1932, %v1896
      %v1965 = vmul.f32 %v1933, %v1897
      %v1966 = vmul.f32 %v1934, %v1898
      %v1967 = vmul.f32 %v1935, %v1899
      %v1968 = vmul.f32 %v1936, %v1900
      %v1969 = vmul.f32 %v1937, %v1901
      %v1970 = vmul.f32 %v1938, %v1902
      %v1971 = vmul.f32 %v1939, %v1903
      %v1972 = vmul.f32 %v1940, %v1904
      %v1973 = vadd.f32 %v1941, %v1800
      %v1974 = vadd.f32 %v1942, %v1801
      %v1975 = vadd.f32 %v1943, %v1802
      %v1976 = vadd.f32 %v1944, %v1803
      %v1977 = vadd.f32 %v1945, %v1804
      %v1978 = vadd.f32 %v1946, %v1805
      %v1979 = vadd.f32 %v1947, %v1806
      %v1980 = vadd.f32 %v1948, %v1807
      %v1981 = vadd.f32 %v1949, %v1808
      %v1982 = vadd.f32 %v1950, %v1809
      %v1983 = vadd.f32 %v1951, %v1810
      %v1984 = vadd.f32 %v1952, %v1811
      %v1985 = vadd.f32 %v1953, %v1812
      %v1986 = vadd.f32 %v1954, %v1813
      %v1987 = vadd.f32 %v1955, %v1814
      %v1988 = vadd.f32 %v1956, %v1815
      %v1989 = vadd.f32 %v1957, %v1816
      %v1990 = vadd.f32 %v1958, %v1817
      %v1991 = vadd.f32 %v1959, %v1818
      %v1992 = vadd.f32 %v1960, %v1819
      %v1993 = vadd.f32 %v1961, %v1820
      %v1994 = vadd.f32 %v1962, %v1821
      %v1995 = vadd.f32 %v1963, %v1822
      %v1996 = vadd.f32 %v1964, %v1823
      %v1997 = vadd.f32 %v1965, %v1824
      %v1998 = vadd.f32 %v1966, %v1825
      %v1999 = vadd.f32 %v1967, %v1826
      %v2000 = vadd.f32 %v1968, %v1827
      %v2001 = vadd.f32 %v1969, %v1828
      %v2002 = vadd.f32 %v1970, %v1829
      %v2003 = vadd.f32 %v1971, %v1830
      %v2004 = vadd.f32 %v1972, %v1831
      %s2005 = scalar_lea.vmem %s259, 256
      %2006 = vst.msk [vmem:[%s2005] sm:$0xff] %vm853, %v1973
      %2007 = vst.msk [vmem:[%s2005 + $0x8] sm:$0xff] %vm853, %v1974
      %2008 = vst.msk [vmem:[%s2005 + $0x10] sm:$0xff] %vm853, %v1975
      %2009 = vst.msk [vmem:[%s2005 + $0x18] sm:$0xff] %vm853, %v1976
      %2010 = vst.msk [vmem:[%s2005 + $0x20] sm:$0xff] %vm853, %v1977
      %2011 = vst.msk [vmem:[%s2005 + $0x28] sm:$0xff] %vm853, %v1978
      %2012 = vst.msk [vmem:[%s2005 + $0x30] sm:$0xff] %vm853, %v1979
      %2013 = vst.msk [vmem:[%s2005 + $0x38] sm:$0xff] %vm853, %v1980
      %2014 = vst.msk [vmem:[%s2005 + $0x40] sm:$0xff] %vm853, %v1981
      %2015 = vst.msk [vmem:[%s2005 + $0x48] sm:$0xff] %vm853, %v1982
      %2016 = vst.msk [vmem:[%s2005 + $0x50] sm:$0xff] %vm853, %v1983
      %2017 = vst.msk [vmem:[%s2005 + $0x58] sm:$0xff] %vm853, %v1984
      %2018 = vst.msk [vmem:[%s2005 + $0x60] sm:$0xff] %vm853, %v1985
      %2019 = vst.msk [vmem:[%s2005 + $0x68] sm:$0xff] %vm853, %v1986
      %2020 = vst.msk [vmem:[%s2005 + $0x70] sm:$0xff] %vm853, %v1987
      %2021 = vst.msk [vmem:[%s2005 + $0x78] sm:$0xff] %vm853, %v1988
      %2022 = vst.msk [vmem:[%s2005 + $0x80] sm:$0xff] %vm853, %v1989
      %2023 = vst.msk [vmem:[%s2005 + $0x88] sm:$0xff] %vm853, %v1990
      %2024 = vst.msk [vmem:[%s2005 + $0x90] sm:$0xff] %vm853, %v1991
      %2025 = vst.msk [vmem:[%s2005 + $0x98] sm:$0xff] %vm853, %v1992
      %2026 = vst.msk [vmem:[%s2005 + $0xa0] sm:$0xff] %vm853, %v1993
      %2027 = vst.msk [vmem:[%s2005 + $0xa8] sm:$0xff] %vm853, %v1994
      %2028 = vst.msk [vmem:[%s2005 + $0xb0] sm:$0xff] %vm853, %v1995
      %2029 = vst.msk [vmem:[%s2005 + $0xb8] sm:$0xff] %vm853, %v1996
      %2030 = vst.msk [vmem:[%s2005 + $0xc0] sm:$0xff] %vm853, %v1997
      %2031 = vst.msk [vmem:[%s2005 + $0xc8] sm:$0xff] %vm853, %v1998
      %2032 = vst.msk [vmem:[%s2005 + $0xd0] sm:$0xff] %vm853, %v1999
      %2033 = vst.msk [vmem:[%s2005 + $0xd8] sm:$0xff] %vm853, %v2000
      %2034 = vst.msk [vmem:[%s2005 + $0xe0] sm:$0xff] %vm853, %v2001
      %2035 = vst.msk [vmem:[%s2005 + $0xe8] sm:$0xff] %vm853, %v2002
      %2036 = vst.msk [vmem:[%s2005 + $0xf0] sm:$0xff] %vm853, %v2003
      %2037 = vst.msk [vmem:[%s2005 + $0xf8] sm:$0xff] %vm853, %v2004
      %s2038 = scalar_lea.vmem %s2, 16
      %v2039 = vld [vmem:[%s2038] sm:$0x3f]
      %s2040 = scalar_lea.vmem %s1, 8
      %v2041 = vld [vmem:[%s2040] sm:$0xf]
      %v2042 = vlaneseq
      %v2043 = vshrl.u32 %v2042, 7
      %v2044 = vsub.s32 0, %v2043
      %v2045 = vrot.slane %v2039, %v2044
      %v2047 = vsel %vm688, %v2041, 0
      %2049 = vmatprep.subr.bf16.mxu0 0
      %2050 = vmatpush1.bf16.msra.mxu0 %v2047
      %2051 = vmatprep.subr.bf16.mxu0 0
      %2052 = vmatpush1.bf16.msra.mxu0 0
      %2053 = vmatprep.subr.bf16.mxu0 0
      %2054 = vmatpush1.bf16.msra.mxu0 0
      %2055 = vmatprep.subr.bf16.mxu0 0
      %2056 = vmatpush1.bf16.msra.mxu0 0
      %2057 = vmatprep.subr.bf16.mxu0 0
      %2058 = vmatpush1.bf16.msra.mxu0 0
      %2059 = vmatprep.subr.bf16.mxu0 0
      %2060 = vmatpush1.bf16.msra.mxu0 0
      %2061 = vmatprep.subr.bf16.mxu0 0
      %2062 = vmatpush1.bf16.msra.mxu0 0
      %2063 = vmatprep.subr.bf16.mxu0 0
      %2064 = vmatpush1.bf16.msra.mxu0 0
      %2065 = vmatprep.subr.bf16.mxu0 0
      %2066 = vmatpush1.bf16.msra.mxu0 0
      %2067 = vmatprep.subr.bf16.mxu0 0
      %2068 = vmatpush1.bf16.msra.mxu0 0
      %2069 = vmatprep.subr.bf16.mxu0 0
      %2070 = vmatpush1.bf16.msra.mxu0 0
      %2071 = vmatprep.subr.bf16.mxu0 0
      %2072 = vmatpush1.bf16.msra.mxu0 0
      %2073 = vmatprep.subr.bf16.mxu0 0
      %2074 = vmatpush1.bf16.msra.mxu0 0
      %2075 = vmatprep.subr.bf16.mxu0 0
      %2076 = vmatpush1.bf16.msra.mxu0 0
      %2077 = vmatprep.subr.bf16.mxu0 0
      %2078 = vmatpush1.bf16.msra.mxu0 0
      %2079 = vmatprep.subr.bf16.mxu0 0
      %2080 = vmatpush1.bf16.msra.mxu0 0
      %2081 = vmatprep.mubr.bf16.mxu0 0
      %2082 = vmatmul.mubr.bf16.gmra.mrb[0].mxu0 %v641
      %v2083 = vpop.f32.mrb[0].mxu0
      %v2084 = vadd.f32 %v2045, %v2083
      %v2085 = vpop.f32.mrb[0].mxu0
      %v2086 = vpop.f32.mrb[0].mxu0
      %v2087 = vadd.f32 %v2045, %v2086
      %v2088 = vpop.f32.mrb[0].mxu0
      %2089 = vmatprep.mubr.bf16.mxu0 0
      %2090 = vmatmul.mubr.bf16.gmra.mrb[0].mxu0 %v644
      %v2091 = vpop.f32.mrb[0].mxu0
      %v2092 = vadd.f32 %v2045, %v2091
      %v2093 = vpop.f32.mrb[0].mxu0
      %v2094 = vpop.f32.mrb[0].mxu0
      %v2095 = vadd.f32 %v2045, %v2094
      %v2096 = vpop.f32.mrb[0].mxu0
      %2097 = vmatprep.mubr.bf16.mxu0 0
      %2098 = vmatmul.mubr.bf16.gmra.mrb[0].mxu0 %v647
      %v2099 = vpop.f32.mrb[0].mxu0
      %v2100 = vadd.f32 %v2045, %v2099
      %v2101 = vpop.f32.mrb[0].mxu0
      %v2102 = vpop.f32.mrb[0].mxu0
      %v2103 = vadd.f32 %v2045, %v2102
      %v2104 = vpop.f32.mrb[0].mxu0
      %2105 = vmatprep.mubr.bf16.mxu0 0
      %2106 = vmatmul.mubr.bf16.gmra.mrb[0].mxu0 %v650
      %v2107 = vpop.f32.mrb[0].mxu0
      %v2108 = vadd.f32 %v2045, %v2107
      %v2109 = vpop.f32.mrb[0].mxu0
      %v2110 = vpop.f32.mrb[0].mxu0
      %v2111 = vadd.f32 %v2045, %v2110
      %v2112 = vpop.f32.mrb[0].mxu0
      %2113 = vmatprep.mubr.bf16.mxu0 0
      %2114 = vmatmul.mubr.bf16.gmra.mrb[0].mxu0 %v653
      %v2115 = vpop.f32.mrb[0].mxu0
      %v2116 = vadd.f32 %v2045, %v2115
      %v2117 = vpop.f32.mrb[0].mxu0
      %v2118 = vpop.f32.mrb[0].mxu0
      %v2119 = vadd.f32 %v2045, %v2118
      %v2120 = vpop.f32.mrb[0].mxu0
      %2121 = vmatprep.mubr.bf16.mxu0 0
      %2122 = vmatmul.mubr.bf16.gmra.mrb[0].mxu0 %v656
      %v2123 = vpop.f32.mrb[0].mxu0
      %v2124 = vadd.f32 %v2045, %v2123
      %v2125 = vpop.f32.mrb[0].mxu0
      %v2126 = vpop.f32.mrb[0].mxu0
      %v2127 = vadd.f32 %v2045, %v2126
      %v2128 = vpop.f32.mrb[0].mxu0
      %2129 = vmatprep.mubr.bf16.mxu0 0
      %2130 = vmatmul.mubr.bf16.gmra.mrb[0].mxu0 %v659
      %v2131 = vpop.f32.mrb[0].mxu0
      %v2132 = vadd.f32 %v2045, %v2131
      %v2133 = vpop.f32.mrb[0].mxu0
      %v2134 = vpop.f32.mrb[0].mxu0
      %v2135 = vadd.f32 %v2045, %v2134
      %v2136 = vpop.f32.mrb[0].mxu0
      %2137 = vmatprep.mubr.bf16.mxu0 0
      %2138 = vmatmul.mubr.bf16.gmra.mrb[0].mxu0 %v662
      %v2139 = vpop.f32.mrb[0].mxu0
      %v2140 = vadd.f32 %v2045, %v2139
      %v2141 = vpop.f32.mrb[0].mxu0
      %v2142 = vpop.f32.mrb[0].mxu0
      %v2143 = vadd.f32 %v2045, %v2142
      %v2144 = vpop.f32.mrb[0].mxu0
      %2145 = vmatprep.mubr.bf16.mxu0 0
      %2146 = vmatmul.mubr.bf16.gmra.mrb[0].mxu0 %v665
      %v2147 = vpop.f32.mrb[0].mxu0
      %v2148 = vadd.f32 %v2045, %v2147
      %v2149 = vpop.f32.mrb[0].mxu0
      %v2150 = vpop.f32.mrb[0].mxu0
      %v2151 = vadd.f32 %v2045, %v2150
      %v2152 = vpop.f32.mrb[0].mxu0
      %2153 = vmatprep.mubr.bf16.mxu0 0
      %2154 = vmatmul.mubr.bf16.gmra.mrb[0].mxu0 %v668
      %v2155 = vpop.f32.mrb[0].mxu0
      %v2156 = vadd.f32 %v2045, %v2155
      %v2157 = vpop.f32.mrb[0].mxu0
      %v2158 = vpop.f32.mrb[0].mxu0
      %v2159 = vadd.f32 %v2045, %v2158
      %v2160 = vpop.f32.mrb[0].mxu0
      %2161 = vmatprep.mubr.bf16.mxu0 0
      %2162 = vmatmul.mubr.bf16.gmra.mrb[0].mxu0 %v671
      %v2163 = vpop.f32.mrb[0].mxu0
      %v2164 = vadd.f32 %v2045, %v2163
      %v2165 = vpop.f32.mrb[0].mxu0
      %v2166 = vpop.f32.mrb[0].mxu0
      %v2167 = vadd.f32 %v2045, %v2166
      %v2168 = vpop.f32.mrb[0].mxu0
      %2169 = vmatprep.mubr.bf16.mxu0 0
      %2170 = vmatmul.mubr.bf16.gmra.mrb[0].mxu0 %v674
      %v2171 = vpop.f32.mrb[0].mxu0
      %v2172 = vadd.f32 %v2045, %v2171
      %v2173 = vpop.f32.mrb[0].mxu0
      %v2174 = vpop.f32.mrb[0].mxu0
      %v2175 = vadd.f32 %v2045, %v2174
      %v2176 = vpop.f32.mrb[0].mxu0
      %2177 = vmatprep.mubr.bf16.mxu0 0
      %2178 = vmatmul.mubr.bf16.gmra.mrb[0].mxu0 %v677
      %v2179 = vpop.f32.mrb[0].mxu0
      %v2180 = vadd.f32 %v2045, %v2179
      %v2181 = vpop.f32.mrb[0].mxu0
      %v2182 = vpop.f32.mrb[0].mxu0
      %v2183 = vadd.f32 %v2045, %v2182
      %v2184 = vpop.f32.mrb[0].mxu0
      %2185 = vmatprep.mubr.bf16.mxu0 0
      %2186 = vmatmul.mubr.bf16.gmra.mrb[0].mxu0 %v680
      %v2187 = vpop.f32.mrb[0].mxu0
      %v2188 = vadd.f32 %v2045, %v2187
      %v2189 = vpop.f32.mrb[0].mxu0
      %v2190 = vpop.f32.mrb[0].mxu0
      %v2191 = vadd.f32 %v2045, %v2190
      %v2192 = vpop.f32.mrb[0].mxu0
      %2193 = vmatprep.mubr.bf16.mxu0 0
      %2194 = vmatmul.mubr.bf16.gmra.mrb[0].mxu0 %v683
      %v2195 = vpop.f32.mrb[0].mxu0
      %v2196 = vadd.f32 %v2045, %v2195
      %v2197 = vpop.f32.mrb[0].mxu0
      %v2198 = vpop.f32.mrb[0].mxu0
      %v2199 = vadd.f32 %v2045, %v2198
      %v2200 = vpop.f32.mrb[0].mxu0
      %2201 = vmatprep.mubr.bf16.mxu0 0
      %2202 = vmatmul.mubr.bf16.gmra.mrb[0].mxu0 %v686
      %v2203 = vpop.f32.mrb[0].mxu0
      %v2204 = vadd.f32 %v2045, %v2203
      %v2205 = vpop.f32.mrb[0].mxu0
      %v2206 = vpop.f32.mrb[0].mxu0
      %v2207 = vadd.f32 %v2045, %v2206
      %v2208 = vpop.f32.mrb[0].mxu0
      %2209 = vdwg.mxu0
      %s2210 = scalar_lea.vmem %s249, 512
      %2211 = vst.msk [vmem:[%s2210] sm:$0xff] %vm853, %v2084
      %2212 = vst.msk [vmem:[%s2210 + $0x8] sm:$0xff] %vm853, %v2087
      %2213 = vst.msk [vmem:[%s2210 + $0x10] sm:$0xff] %vm853, %v2092
      %2214 = vst.msk [vmem:[%s2210 + $0x18] sm:$0xff] %vm853, %v2095
      %2215 = vst.msk [vmem:[%s2210 + $0x20] sm:$0xff] %vm853, %v2100
      %2216 = vst.msk [vmem:[%s2210 + $0x28] sm:$0xff] %vm853, %v2103
      %2217 = vst.msk [vmem:[%s2210 + $0x30] sm:$0xff] %vm853, %v2108
      %2218 = vst.msk [vmem:[%s2210 + $0x38] sm:$0xff] %vm853, %v2111
      %2219 = vst.msk [vmem:[%s2210 + $0x40] sm:$0xff] %vm853, %v2116
      %2220 = vst.msk [vmem:[%s2210 + $0x48] sm:$0xff] %vm853, %v2119
      %2221 = vst.msk [vmem:[%s2210 + $0x50] sm:$0xff] %vm853, %v2124
      %2222 = vst.msk [vmem:[%s2210 + $0x58] sm:$0xff] %vm853, %v2127
      %2223 = vst.msk [vmem:[%s2210 + $0x60] sm:$0xff] %vm853, %v2132
      %2224 = vst.msk [vmem:[%s2210 + $0x68] sm:$0xff] %vm853, %v2135
      %2225 = vst.msk [vmem:[%s2210 + $0x70] sm:$0xff] %vm853, %v2140
      %2226 = vst.msk [vmem:[%s2210 + $0x78] sm:$0xff] %vm853, %v2143
      %2227 = vst.msk [vmem:[%s2210 + $0x80] sm:$0xff] %vm853, %v2148
      %2228 = vst.msk [vmem:[%s2210 + $0x88] sm:$0xff] %vm853, %v2151
      %2229 = vst.msk [vmem:[%s2210 + $0x90] sm:$0xff] %vm853, %v2156
      %2230 = vst.msk [vmem:[%s2210 + $0x98] sm:$0xff] %vm853, %v2159
      %2231 = vst.msk [vmem:[%s2210 + $0xa0] sm:$0xff] %vm853, %v2164
      %2232 = vst.msk [vmem:[%s2210 + $0xa8] sm:$0xff] %vm853, %v2167
      %2233 = vst.msk [vmem:[%s2210 + $0xb0] sm:$0xff] %vm853, %v2172
      %2234 = vst.msk [vmem:[%s2210 + $0xb8] sm:$0xff] %vm853, %v2175
      %2235 = vst.msk [vmem:[%s2210 + $0xc0] sm:$0xff] %vm853, %v2180
      %2236 = vst.msk [vmem:[%s2210 + $0xc8] sm:$0xff] %vm853, %v2183
      %2237 = vst.msk [vmem:[%s2210 + $0xd0] sm:$0xff] %vm853, %v2188
      %2238 = vst.msk [vmem:[%s2210 + $0xd8] sm:$0xff] %vm853, %v2191
      %2239 = vst.msk [vmem:[%s2210 + $0xe0] sm:$0xff] %vm853, %v2196
      %2240 = vst.msk [vmem:[%s2210 + $0xe8] sm:$0xff] %vm853, %v2199
      %2241 = vst.msk [vmem:[%s2210 + $0xf0] sm:$0xff] %vm853, %v2204
      %2242 = vst.msk [vmem:[%s2210 + $0xf8] sm:$0xff] %vm853, %v2207
      %v2243 = vmul.f32 %v2084, 0.5
      %v2244 = vmul.f32 %v2087, 0.5
      %v2245 = vmul.f32 %v2092, 0.5
      %v2246 = vmul.f32 %v2095, 0.5
      %v2247 = vmul.f32 %v2100, 0.5
      %v2248 = vmul.f32 %v2103, 0.5
      %v2249 = vmul.f32 %v2108, 0.5
      %v2250 = vmul.f32 %v2111, 0.5
      %v2251 = vmul.f32 %v2116, 0.5
      %v2252 = vmul.f32 %v2119, 0.5
      %v2253 = vmul.f32 %v2124, 0.5
      %v2254 = vmul.f32 %v2127, 0.5
      %v2255 = vmul.f32 %v2132, 0.5
      %v2256 = vmul.f32 %v2135, 0.5
      %v2257 = vmul.f32 %v2140, 0.5
      %v2258 = vmul.f32 %v2143, 0.5
      %v2259 = vmul.f32 %v2148, 0.5
      %v2260 = vmul.f32 %v2151, 0.5
      %v2261 = vmul.f32 %v2156, 0.5
      %v2262 = vmul.f32 %v2159, 0.5
      %v2263 = vmul.f32 %v2164, 0.5
      %v2264 = vmul.f32 %v2167, 0.5
      %v2265 = vmul.f32 %v2172, 0.5
      %v2266 = vmul.f32 %v2175, 0.5
      %v2267 = vmul.f32 %v2180, 0.5
      %v2268 = vmul.f32 %v2183, 0.5
      %v2269 = vmul.f32 %v2188, 0.5
      %v2270 = vmul.f32 %v2191, 0.5
      %v2271 = vmul.f32 %v2196, 0.5
      %v2272 = vmul.f32 %v2199, 0.5
      %v2273 = vmul.f32 %v2204, 0.5
      %v2274 = vmul.f32 %v2207, 0.5
      %v2275 = vtanh.pop %v2243
      %v2276 = vtanh.pop %v2244
      %v2277 = vtanh.pop %v2245
      %v2278 = vtanh.pop %v2246
      %v2279 = vtanh.pop %v2247
      %v2280 = vtanh.pop %v2248
      %v2281 = vtanh.pop %v2249
      %v2282 = vtanh.pop %v2250
      %v2283 = vtanh.pop %v2251
      %v2284 = vtanh.pop %v2252
      %v2285 = vtanh.pop %v2253
      %v2286 = vtanh.pop %v2254
      %v2287 = vtanh.pop %v2255
      %v2288 = vtanh.pop %v2256
      %v2289 = vtanh.pop %v2257
      %v2290 = vtanh.pop %v2258
      %v2291 = vtanh.pop %v2259
      %v2292 = vtanh.pop %v2260
      %v2293 = vtanh.pop %v2261
      %v2294 = vtanh.pop %v2262
      %v2295 = vtanh.pop %v2263
      %v2296 = vtanh.pop %v2264
      %v2297 = vtanh.pop %v2265
      %v2298 = vtanh.pop %v2266
      %v2299 = vtanh.pop %v2267
      %v2300 = vtanh.pop %v2268
      %v2301 = vtanh.pop %v2269
      %v2302 = vtanh.pop %v2270
      %v2303 = vtanh.pop %v2271
      %v2304 = vtanh.pop %v2272
      %v2305 = vtanh.pop %v2273
      %v2306 = vtanh.pop %v2274
      %v2307 = vmul.f32 %v2275, 0.5
      %v2308 = vmul.f32 %v2276, 0.5
      %v2309 = vmul.f32 %v2277, 0.5
      %v2310 = vmul.f32 %v2278, 0.5
      %v2311 = vmul.f32 %v2279, 0.5
      %v2312 = vmul.f32 %v2280, 0.5
      %v2313 = vmul.f32 %v2281, 0.5
      %v2314 = vmul.f32 %v2282, 0.5
      %v2315 = vmul.f32 %v2283, 0.5
      %v2316 = vmul.f32 %v2284, 0.5
      %v2317 = vmul.f32 %v2285, 0.5
      %v2318 = vmul.f32 %v2286, 0.5
      %v2319 = vmul.f32 %v2287, 0.5
      %v2320 = vmul.f32 %v2288, 0.5
      %v2321 = vmul.f32 %v2289, 0.5
      %v2322 = vmul.f32 %v2290, 0.5
      %v2323 = vmul.f32 %v2291, 0.5
      %v2324 = vmul.f32 %v2292, 0.5
      %v2325 = vmul.f32 %v2293, 0.5
      %v2326 = vmul.f32 %v2294, 0.5
      %v2327 = vmul.f32 %v2295, 0.5
      %v2328 = vmul.f32 %v2296, 0.5
      %v2329 = vmul.f32 %v2297, 0.5
      %v2330 = vmul.f32 %v2298, 0.5
      %v2331 = vmul.f32 %v2299, 0.5
      %v2332 = vmul.f32 %v2300, 0.5
      %v2333 = vmul.f32 %v2301, 0.5
      %v2334 = vmul.f32 %v2302, 0.5
      %v2335 = vmul.f32 %v2303, 0.5
      %v2336 = vmul.f32 %v2304, 0.5
      %v2337 = vmul.f32 %v2305, 0.5
      %v2338 = vmul.f32 %v2306, 0.5
      %v2339 = vadd.f32 %v2307, 0.5
      %v2340 = vadd.f32 %v2308, 0.5
      %v2341 = vadd.f32 %v2309, 0.5
      %v2342 = vadd.f32 %v2310, 0.5
      %v2343 = vadd.f32 %v2311, 0.5
      %v2344 = vadd.f32 %v2312, 0.5
      %v2345 = vadd.f32 %v2313, 0.5
      %v2346 = vadd.f32 %v2314, 0.5
      %v2347 = vadd.f32 %v2315, 0.5
      %v2348 = vadd.f32 %v2316, 0.5
      %v2349 = vadd.f32 %v2317, 0.5
      %v2350 = vadd.f32 %v2318, 0.5
      %v2351 = vadd.f32 %v2319, 0.5
      %v2352 = vadd.f32 %v2320, 0.5
      %v2353 = vadd.f32 %v2321, 0.5
      %v2354 = vadd.f32 %v2322, 0.5
      %v2355 = vadd.f32 %v2323, 0.5
      %v2356 = vadd.f32 %v2324, 0.5
      %v2357 = vadd.f32 %v2325, 0.5
      %v2358 = vadd.f32 %v2326, 0.5
      %v2359 = vadd.f32 %v2327, 0.5
      %v2360 = vadd.f32 %v2328, 0.5
      %v2361 = vadd.f32 %v2329, 0.5
      %v2362 = vadd.f32 %v2330, 0.5
      %v2363 = vadd.f32 %v2331, 0.5
      %v2364 = vadd.f32 %v2332, 0.5
      %v2365 = vadd.f32 %v2333, 0.5
      %v2366 = vadd.f32 %v2334, 0.5
      %v2367 = vadd.f32 %v2335, 0.5
      %v2368 = vadd.f32 %v2336, 0.5
      %v2369 = vadd.f32 %v2337, 0.5
      %v2370 = vadd.f32 %v2338, 0.5
      %v2371 = vlaneseq
      %v2372 = vshrl.u32 %v2371, 7
      %v2373 = vsub.s32 3, %v2372
      %v2374 = vrot.slane %v2039, %v2373
      %v2375 = vmul.f32 %v521, %v2374
      %v2376 = vmul.f32 %v522, %v2374
      %v2377 = vmul.f32 %v523, %v2374
      %v2378 = vmul.f32 %v524, %v2374
      %v2379 = vmul.f32 %v525, %v2374
      %v2380 = vmul.f32 %v526, %v2374
      %v2381 = vmul.f32 %v527, %v2374
      %v2382 = vmul.f32 %v528, %v2374
      %v2383 = vmul.f32 %v529, %v2374
      %v2384 = vmul.f32 %v530, %v2374
      %v2385 = vmul.f32 %v531, %v2374
      %v2386 = vmul.f32 %v532, %v2374
      %v2387 = vmul.f32 %v533, %v2374
      %v2388 = vmul.f32 %v534, %v2374
      %v2389 = vmul.f32 %v535, %v2374
      %v2390 = vmul.f32 %v536, %v2374
      %v2391 = vmul.f32 %v537, %v2374
      %v2392 = vmul.f32 %v538, %v2374
      %v2393 = vmul.f32 %v539, %v2374
      %v2394 = vmul.f32 %v540, %v2374
      %v2395 = vmul.f32 %v541, %v2374
      %v2396 = vmul.f32 %v542, %v2374
      %v2397 = vmul.f32 %v543, %v2374
      %v2398 = vmul.f32 %v544, %v2374
      %v2399 = vmul.f32 %v545, %v2374
      %v2400 = vmul.f32 %v546, %v2374
      %v2401 = vmul.f32 %v547, %v2374
      %v2402 = vmul.f32 %v548, %v2374
      %v2403 = vmul.f32 %v549, %v2374
      %v2404 = vmul.f32 %v550, %v2374
      %v2405 = vmul.f32 %v551, %v2374
      %v2406 = vmul.f32 %v552, %v2374
      %v2407 = vlaneseq
      %v2408 = vshrl.u32 %v2407, 7
      %v2409 = vsub.s32 4, %v2408
      %v2410 = vrot.slane %v2039, %v2409
      %v2411 = vmul.f32 %v457, %v2410
      %v2412 = vmul.f32 %v458, %v2410
      %v2413 = vmul.f32 %v459, %v2410
      %v2414 = vmul.f32 %v460, %v2410
      %v2415 = vmul.f32 %v461, %v2410
      %v2416 = vmul.f32 %v462, %v2410
      %v2417 = vmul.f32 %v463, %v2410
      %v2418 = vmul.f32 %v464, %v2410
      %v2419 = vmul.f32 %v465, %v2410
      %v2420 = vmul.f32 %v466, %v2410
      %v2421 = vmul.f32 %v467, %v2410
      %v2422 = vmul.f32 %v468, %v2410
      %v2423 = vmul.f32 %v469, %v2410
      %v2424 = vmul.f32 %v470, %v2410
      %v2425 = vmul.f32 %v471, %v2410
      %v2426 = vmul.f32 %v472, %v2410
      %v2427 = vmul.f32 %v473, %v2410
      %v2428 = vmul.f32 %v474, %v2410
      %v2429 = vmul.f32 %v475, %v2410
      %v2430 = vmul.f32 %v476, %v2410
      %v2431 = vmul.f32 %v477, %v2410
      %v2432 = vmul.f32 %v478, %v2410
      %v2433 = vmul.f32 %v479, %v2410
      %v2434 = vmul.f32 %v480, %v2410
      %v2435 = vmul.f32 %v481, %v2410
      %v2436 = vmul.f32 %v482, %v2410
      %v2437 = vmul.f32 %v483, %v2410
      %v2438 = vmul.f32 %v484, %v2410
      %v2439 = vmul.f32 %v485, %v2410
      %v2440 = vmul.f32 %v486, %v2410
      %v2441 = vmul.f32 %v487, %v2410
      %v2442 = vmul.f32 %v488, %v2410
      %v2443 = vadd.f32 %v2375, %v2411
      %v2444 = vadd.f32 %v2376, %v2412
      %v2445 = vadd.f32 %v2377, %v2413
      %v2446 = vadd.f32 %v2378, %v2414
      %v2447 = vadd.f32 %v2379, %v2415
      %v2448 = vadd.f32 %v2380, %v2416
      %v2449 = vadd.f32 %v2381, %v2417
      %v2450 = vadd.f32 %v2382, %v2418
      %v2451 = vadd.f32 %v2383, %v2419
      %v2452 = vadd.f32 %v2384, %v2420
      %v2453 = vadd.f32 %v2385, %v2421
      %v2454 = vadd.f32 %v2386, %v2422
      %v2455 = vadd.f32 %v2387, %v2423
      %v2456 = vadd.f32 %v2388, %v2424
      %v2457 = vadd.f32 %v2389, %v2425
      %v2458 = vadd.f32 %v2390, %v2426
      %v2459 = vadd.f32 %v2391, %v2427
      %v2460 = vadd.f32 %v2392, %v2428
      %v2461 = vadd.f32 %v2393, %v2429
      %v2462 = vadd.f32 %v2394, %v2430
      %v2463 = vadd.f32 %v2395, %v2431
      %v2464 = vadd.f32 %v2396, %v2432
      %v2465 = vadd.f32 %v2397, %v2433
      %v2466 = vadd.f32 %v2398, %v2434
      %v2467 = vadd.f32 %v2399, %v2435
      %v2468 = vadd.f32 %v2400, %v2436
      %v2469 = vadd.f32 %v2401, %v2437
      %v2470 = vadd.f32 %v2402, %v2438
      %v2471 = vadd.f32 %v2403, %v2439
      %v2472 = vadd.f32 %v2404, %v2440
      %v2473 = vadd.f32 %v2405, %v2441
      %v2474 = vadd.f32 %v2406, %v2442
      %v2475 = vlaneseq
      %v2476 = vshrl.u32 %v2475, 7
      %v2477 = vsub.s32 5, %v2476
      %v2478 = vrot.slane %v2039, %v2477
      %v2479 = vadd.f32 %v2443, %v2478
      %v2480 = vadd.f32 %v2444, %v2478
      %v2481 = vadd.f32 %v2445, %v2478
      %v2482 = vadd.f32 %v2446, %v2478
      %v2483 = vadd.f32 %v2447, %v2478
      %v2484 = vadd.f32 %v2448, %v2478
      %v2485 = vadd.f32 %v2449, %v2478
      %v2486 = vadd.f32 %v2450, %v2478
      %v2487 = vadd.f32 %v2451, %v2478
      %v2488 = vadd.f32 %v2452, %v2478
      %v2489 = vadd.f32 %v2453, %v2478
      %v2490 = vadd.f32 %v2454, %v2478
      %v2491 = vadd.f32 %v2455, %v2478
      %v2492 = vadd.f32 %v2456, %v2478
      %v2493 = vadd.f32 %v2457, %v2478
      %v2494 = vadd.f32 %v2458, %v2478
      %v2495 = vadd.f32 %v2459, %v2478
      %v2496 = vadd.f32 %v2460, %v2478
      %v2497 = vadd.f32 %v2461, %v2478
      %v2498 = vadd.f32 %v2462, %v2478
      %v2499 = vadd.f32 %v2463, %v2478
      %v2500 = vadd.f32 %v2464, %v2478
      %v2501 = vadd.f32 %v2465, %v2478
      %v2502 = vadd.f32 %v2466, %v2478
      %v2503 = vadd.f32 %v2467, %v2478
      %v2504 = vadd.f32 %v2468, %v2478
      %v2505 = vadd.f32 %v2469, %v2478
      %v2506 = vadd.f32 %v2470, %v2478
      %v2507 = vadd.f32 %v2471, %v2478
      %v2508 = vadd.f32 %v2472, %v2478
      %v2509 = vadd.f32 %v2473, %v2478
      %v2510 = vadd.f32 %v2474, %v2478
      %v2511 = vlaneseq
      %v2512 = vshrl.u32 %v2511, 7
      %v2513 = vsub.s32 2, %v2512
      %v2514 = vrot.slane %v2039, %v2513
      %v2515 = vmul.f32 %v2514, %v2339
      %v2516 = vmul.f32 %v2514, %v2340
      %v2517 = vmul.f32 %v2514, %v2341
      %v2518 = vmul.f32 %v2514, %v2342
      %v2519 = vmul.f32 %v2514, %v2343
      %v2520 = vmul.f32 %v2514, %v2344
      %v2521 = vmul.f32 %v2514, %v2345
      %v2522 = vmul.f32 %v2514, %v2346
      %v2523 = vmul.f32 %v2514, %v2347
      %v2524 = vmul.f32 %v2514, %v2348
      %v2525 = vmul.f32 %v2514, %v2349
      %v2526 = vmul.f32 %v2514, %v2350
      %v2527 = vmul.f32 %v2514, %v2351
      %v2528 = vmul.f32 %v2514, %v2352
      %v2529 = vmul.f32 %v2514, %v2353
      %v2530 = vmul.f32 %v2514, %v2354
      %v2531 = vmul.f32 %v2514, %v2355
      %v2532 = vmul.f32 %v2514, %v2356
      %v2533 = vmul.f32 %v2514, %v2357
      %v2534 = vmul.f32 %v2514, %v2358
      %v2535 = vmul.f32 %v2514, %v2359
      %v2536 = vmul.f32 %v2514, %v2360
      %v2537 = vmul.f32 %v2514, %v2361
      %v2538 = vmul.f32 %v2514, %v2362
      %v2539 = vmul.f32 %v2514, %v2363
      %v2540 = vmul.f32 %v2514, %v2364
      %v2541 = vmul.f32 %v2514, %v2365
      %v2542 = vmul.f32 %v2514, %v2366
      %v2543 = vmul.f32 %v2514, %v2367
      %v2544 = vmul.f32 %v2514, %v2368
      %v2545 = vmul.f32 %v2514, %v2369
      %v2546 = vmul.f32 %v2514, %v2370
      %v2547 = vsub.f32 1.0, %v2039
      %v2548 = vlaneseq
      %v2549 = vshrl.u32 %v2548, 7
      %v2550 = vsub.s32 2, %v2549
      %v2551 = vrot.slane %v2547, %v2550
      %v2552 = vadd.f32 %v2515, %v2551
      %v2553 = vadd.f32 %v2516, %v2551
      %v2554 = vadd.f32 %v2517, %v2551
      %v2555 = vadd.f32 %v2518, %v2551
      %v2556 = vadd.f32 %v2519, %v2551
      %v2557 = vadd.f32 %v2520, %v2551
      %v2558 = vadd.f32 %v2521, %v2551
      %v2559 = vadd.f32 %v2522, %v2551
      %v2560 = vadd.f32 %v2523, %v2551
      %v2561 = vadd.f32 %v2524, %v2551
      %v2562 = vadd.f32 %v2525, %v2551
      %v2563 = vadd.f32 %v2526, %v2551
      %v2564 = vadd.f32 %v2527, %v2551
      %v2565 = vadd.f32 %v2528, %v2551
      %v2566 = vadd.f32 %v2529, %v2551
      %v2567 = vadd.f32 %v2530, %v2551
      %v2568 = vadd.f32 %v2531, %v2551
      %v2569 = vadd.f32 %v2532, %v2551
      %v2570 = vadd.f32 %v2533, %v2551
      %v2571 = vadd.f32 %v2534, %v2551
      %v2572 = vadd.f32 %v2535, %v2551
      %v2573 = vadd.f32 %v2536, %v2551
      %v2574 = vadd.f32 %v2537, %v2551
      %v2575 = vadd.f32 %v2538, %v2551
      %v2576 = vadd.f32 %v2539, %v2551
      %v2577 = vadd.f32 %v2540, %v2551
      %v2578 = vadd.f32 %v2541, %v2551
      %v2579 = vadd.f32 %v2542, %v2551
      %v2580 = vadd.f32 %v2543, %v2551
      %v2581 = vadd.f32 %v2544, %v2551
      %v2582 = vadd.f32 %v2545, %v2551
      %v2583 = vadd.f32 %v2546, %v2551
      %v2584 = vlaneseq
      %v2585 = vshrl.u32 %v2584, 7
      %v2586 = vsub.s32 1, %v2585
      %v2587 = vrot.slane %v2039, %v2586
      %v2588 = vmul.f32 %v2339, %v2587
      %v2589 = vmul.f32 %v2340, %v2587
      %v2590 = vmul.f32 %v2341, %v2587
      %v2591 = vmul.f32 %v2342, %v2587
      %v2592 = vmul.f32 %v2343, %v2587
      %v2593 = vmul.f32 %v2344, %v2587
      %v2594 = vmul.f32 %v2345, %v2587
      %v2595 = vmul.f32 %v2346, %v2587
      %v2596 = vmul.f32 %v2347, %v2587
      %v2597 = vmul.f32 %v2348, %v2587
      %v2598 = vmul.f32 %v2349, %v2587
      %v2599 = vmul.f32 %v2350, %v2587
      %v2600 = vmul.f32 %v2351, %v2587
      %v2601 = vmul.f32 %v2352, %v2587
      %v2602 = vmul.f32 %v2353, %v2587
      %v2603 = vmul.f32 %v2354, %v2587
      %v2604 = vmul.f32 %v2355, %v2587
      %v2605 = vmul.f32 %v2356, %v2587
      %v2606 = vmul.f32 %v2357, %v2587
      %v2607 = vmul.f32 %v2358, %v2587
      %v2608 = vmul.f32 %v2359, %v2587
      %v2609 = vmul.f32 %v2360, %v2587
      %v2610 = vmul.f32 %v2361, %v2587
      %v2611 = vmul.f32 %v2362, %v2587
      %v2612 = vmul.f32 %v2363, %v2587
      %v2613 = vmul.f32 %v2364, %v2587
      %v2614 = vmul.f32 %v2365, %v2587
      %v2615 = vmul.f32 %v2366, %v2587
      %v2616 = vmul.f32 %v2367, %v2587
      %v2617 = vmul.f32 %v2368, %v2587
      %v2618 = vmul.f32 %v2369, %v2587
      %v2619 = vmul.f32 %v2370, %v2587
      %v2620 = vmul.f32 %v2588, %v2552
      %v2621 = vmul.f32 %v2589, %v2553
      %v2622 = vmul.f32 %v2590, %v2554
      %v2623 = vmul.f32 %v2591, %v2555
      %v2624 = vmul.f32 %v2592, %v2556
      %v2625 = vmul.f32 %v2593, %v2557
      %v2626 = vmul.f32 %v2594, %v2558
      %v2627 = vmul.f32 %v2595, %v2559
      %v2628 = vmul.f32 %v2596, %v2560
      %v2629 = vmul.f32 %v2597, %v2561
      %v2630 = vmul.f32 %v2598, %v2562
      %v2631 = vmul.f32 %v2599, %v2563
      %v2632 = vmul.f32 %v2600, %v2564
      %v2633 = vmul.f32 %v2601, %v2565
      %v2634 = vmul.f32 %v2602, %v2566
      %v2635 = vmul.f32 %v2603, %v2567
      %v2636 = vmul.f32 %v2604, %v2568
      %v2637 = vmul.f32 %v2605, %v2569
      %v2638 = vmul.f32 %v2606, %v2570
      %v2639 = vmul.f32 %v2607, %v2571
      %v2640 = vmul.f32 %v2608, %v2572
      %v2641 = vmul.f32 %v2609, %v2573
      %v2642 = vmul.f32 %v2610, %v2574
      %v2643 = vmul.f32 %v2611, %v2575
      %v2644 = vmul.f32 %v2612, %v2576
      %v2645 = vmul.f32 %v2613, %v2577
      %v2646 = vmul.f32 %v2614, %v2578
      %v2647 = vmul.f32 %v2615, %v2579
      %v2648 = vmul.f32 %v2616, %v2580
      %v2649 = vmul.f32 %v2617, %v2581
      %v2650 = vmul.f32 %v2618, %v2582
      %v2651 = vmul.f32 %v2619, %v2583
      %v2652 = vadd.f32 %v2620, %v2479
      %v2653 = vadd.f32 %v2621, %v2480
      %v2654 = vadd.f32 %v2622, %v2481
      %v2655 = vadd.f32 %v2623, %v2482
      %v2656 = vadd.f32 %v2624, %v2483
      %v2657 = vadd.f32 %v2625, %v2484
      %v2658 = vadd.f32 %v2626, %v2485
      %v2659 = vadd.f32 %v2627, %v2486
      %v2660 = vadd.f32 %v2628, %v2487
      %v2661 = vadd.f32 %v2629, %v2488
      %v2662 = vadd.f32 %v2630, %v2489
      %v2663 = vadd.f32 %v2631, %v2490
      %v2664 = vadd.f32 %v2632, %v2491
      %v2665 = vadd.f32 %v2633, %v2492
      %v2666 = vadd.f32 %v2634, %v2493
      %v2667 = vadd.f32 %v2635, %v2494
      %v2668 = vadd.f32 %v2636, %v2495
      %v2669 = vadd.f32 %v2637, %v2496
      %v2670 = vadd.f32 %v2638, %v2497
      %v2671 = vadd.f32 %v2639, %v2498
      %v2672 = vadd.f32 %v2640, %v2499
      %v2673 = vadd.f32 %v2641, %v2500
      %v2674 = vadd.f32 %v2642, %v2501
      %v2675 = vadd.f32 %v2643, %v2502
      %v2676 = vadd.f32 %v2644, %v2503
      %v2677 = vadd.f32 %v2645, %v2504
      %v2678 = vadd.f32 %v2646, %v2505
      %v2679 = vadd.f32 %v2647, %v2506
      %v2680 = vadd.f32 %v2648, %v2507
      %v2681 = vadd.f32 %v2649, %v2508
      %v2682 = vadd.f32 %v2650, %v2509
      %v2683 = vadd.f32 %v2651, %v2510
      %s2684 = scalar_lea.vmem %s259, 512
      %2685 = vst.msk [vmem:[%s2684] sm:$0xff] %vm853, %v2652
      %2686 = vst.msk [vmem:[%s2684 + $0x8] sm:$0xff] %vm853, %v2653
      %2687 = vst.msk [vmem:[%s2684 + $0x10] sm:$0xff] %vm853, %v2654
      %2688 = vst.msk [vmem:[%s2684 + $0x18] sm:$0xff] %vm853, %v2655
      %2689 = vst.msk [vmem:[%s2684 + $0x20] sm:$0xff] %vm853, %v2656
      %2690 = vst.msk [vmem:[%s2684 + $0x28] sm:$0xff] %vm853, %v2657
      %2691 = vst.msk [vmem:[%s2684 + $0x30] sm:$0xff] %vm853, %v2658
      %2692 = vst.msk [vmem:[%s2684 + $0x38] sm:$0xff] %vm853, %v2659
      %2693 = vst.msk [vmem:[%s2684 + $0x40] sm:$0xff] %vm853, %v2660
      %2694 = vst.msk [vmem:[%s2684 + $0x48] sm:$0xff] %vm853, %v2661
      %2695 = vst.msk [vmem:[%s2684 + $0x50] sm:$0xff] %vm853, %v2662
      %2696 = vst.msk [vmem:[%s2684 + $0x58] sm:$0xff] %vm853, %v2663
      %2697 = vst.msk [vmem:[%s2684 + $0x60] sm:$0xff] %vm853, %v2664
      %2698 = vst.msk [vmem:[%s2684 + $0x68] sm:$0xff] %vm853, %v2665
      %2699 = vst.msk [vmem:[%s2684 + $0x70] sm:$0xff] %vm853, %v2666
      %2700 = vst.msk [vmem:[%s2684 + $0x78] sm:$0xff] %vm853, %v2667
      %2701 = vst.msk [vmem:[%s2684 + $0x80] sm:$0xff] %vm853, %v2668
      %2702 = vst.msk [vmem:[%s2684 + $0x88] sm:$0xff] %vm853, %v2669
      %2703 = vst.msk [vmem:[%s2684 + $0x90] sm:$0xff] %vm853, %v2670
      %2704 = vst.msk [vmem:[%s2684 + $0x98] sm:$0xff] %vm853, %v2671
      %2705 = vst.msk [vmem:[%s2684 + $0xa0] sm:$0xff] %vm853, %v2672
      %2706 = vst.msk [vmem:[%s2684 + $0xa8] sm:$0xff] %vm853, %v2673
      %2707 = vst.msk [vmem:[%s2684 + $0xb0] sm:$0xff] %vm853, %v2674
      %2708 = vst.msk [vmem:[%s2684 + $0xb8] sm:$0xff] %vm853, %v2675
      %2709 = vst.msk [vmem:[%s2684 + $0xc0] sm:$0xff] %vm853, %v2676
      %2710 = vst.msk [vmem:[%s2684 + $0xc8] sm:$0xff] %vm853, %v2677
      %2711 = vst.msk [vmem:[%s2684 + $0xd0] sm:$0xff] %vm853, %v2678
      %2712 = vst.msk [vmem:[%s2684 + $0xd8] sm:$0xff] %vm853, %v2679
      %2713 = vst.msk [vmem:[%s2684 + $0xe0] sm:$0xff] %vm853, %v2680
      %2714 = vst.msk [vmem:[%s2684 + $0xe8] sm:$0xff] %vm853, %v2681
      %2715 = vst.msk [vmem:[%s2684 + $0xf0] sm:$0xff] %vm853, %v2682
      %2716 = vst.msk [vmem:[%s2684 + $0xf8] sm:$0xff] %vm853, %v2683
      %s2717 = smul.u32 32, %s21
      %p2718 = scmp.lt.s32.totalorder %s20, 1
      %s2719 = scalar_select %p2718, %s20, 1
      %p2720 = scmp.lt.s32.totalorder %s2717, 31
      %s2721 = scalar_select %p2720, %s2717, 31
      %s2722 = smul.addr %s2719, 96
      %s2723 = sadd.s32 %s2721, %s2722
      %s2724 = smul.addr %s2723, 8
      %s2725 = scalar_lea.vmem %s3, %s2724
      %s2726 = smul.u32 32, %s21
      %p2727 = scmp.lt.s32.totalorder %s20, 1
      %s2728 = scalar_select %p2727, %s20, 1
      %p2729 = scmp.lt.s32.totalorder %s2726, 31
      %s2730 = scalar_select %p2729, %s2726, 31
      %s2731 = smul.addr %s2728, 96
      %s2732 = sadd.s32 %s2730, %s2731
      %s2733 = smul.addr %s2732, 8
      %s2734 = scalar_lea.vmem %s4, %s2733
      // Predicated region
      $region33: #{tpu_custom_call.1} parent=31 // pred_check
        %p2735 = pneg %p118
      $region34: #{tpu_custom_call.1} parent=31 // pred_check_branch
        %2737 = sbr.rel (%p2735) target = $region36
      $region35: #{tpu_custom_call.1} parent=31 // pred_region
        %s2738 = smul.u32 32, %s21
      $region36: #{tpu_custom_call.1} parent=31 // pred_fallthru
        _
      // Predicated region
      $region37: #{tpu_custom_call.1} parent=31 // pred_check
        %p2739 = pneg %p146
      $region38: #{tpu_custom_call.1} parent=31 // pred_check_branch
        %2741 = sbr.rel (%p2739) target = $region40
      $region39: #{tpu_custom_call.1} parent=31 // pred_region
        %s2742 = smul.u32 32, %s21
      $region40: #{tpu_custom_call.1} parent=31 // pred_fallthru
        _
    $region32: #{tpu_custom_call.1} parent=5 // pred_fallthru
      _
    %p2743 = scmp.le.s32.totalorder 2, %s11
    // Predicated region
    $region41: #{tpu_custom_call.1} parent=5 // pred_check
      %p2744 = pneg %p2743
    $region42: #{tpu_custom_call.1} parent=5 // pred_check_branch
      %2746 = sbr.rel (%p2744) target = $region44
    $region43: #{tpu_custom_call.1} parent=5 // pred_region
      %s2747 = ssub.s32 %s11, 2
      // Predicated region
      $region45: #{tpu_custom_call.1} parent=43 // pred_check
        %p2748 = pneg %p124
      $region46: #{tpu_custom_call.1} parent=43 // pred_check_branch
        %2750 = sbr.rel (%p2748) target = $region48
      $region47: #{tpu_custom_call.1} parent=43 // pred_region
        %s2751 = smul.u32 32, %s23
        %p2752 = scmp.lt.s32.totalorder %s22, 1
        %s2753 = scalar_select %p2752, %s22, 1
        %p2754 = scmp.lt.s32.totalorder %s2751, 31
        %s2755 = scalar_select %p2754, %s2751, 31
        %s2756 = smul.addr %s2753, 96
        %s2757 = sadd.s32 %s2755, %s2756
        %s2758 = smul.addr %s2757, 8
        %s2759 = scalar_lea.vmem %s3, %s2758
      $region48: #{tpu_custom_call.1} parent=43 // pred_fallthru
        _
      // Predicated region
      $region49: #{tpu_custom_call.1} parent=43 // pred_check
        %p2760 = pneg %p152
      $region50: #{tpu_custom_call.1} parent=43 // pred_check_branch
        %2762 = sbr.rel (%p2760) target = $region52
      $region51: #{tpu_custom_call.1} parent=43 // pred_region
        %s2763 = smul.u32 32, %s23
        %p2764 = scmp.lt.s32.totalorder %s22, 1
        %s2765 = scalar_select %p2764, %s22, 1
        %p2766 = scmp.lt.s32.totalorder %s2763, 31
        %s2767 = scalar_select %p2766, %s2763, 31
        %s2768 = smul.addr %s2765, 96
        %s2769 = sadd.s32 %s2767, %s2768
        %s2770 = smul.addr %s2769, 8
        %s2771 = scalar_lea.vmem %s4, %s2770
      $region52: #{tpu_custom_call.1} parent=43 // pred_fallthru
        _
    $region44: #{tpu_custom_call.1} parent=5 // pred_fallthru
      _
  $region6: #{tpu_custom_call.1} parent=0 // loop_footer
    %s15 = sadd.s32 1, %s11
  $region7: #{tpu_custom_call.1} parent=0 // loop_footer_branch
    %10 = sbr.rel target = $region3
  $region8: #{tpu_custom_call.1} parent=0 // loop_exit
    _

</llo_original>
